<compile_context>
chip_gen: v7x
topology: tpu7x:2x2x1
jax: 0.10.0
libtpu: 0.0.40
codegen_flags: <defaults>
</compile_context>

<pallas_src>
import functools

import jax
import jax.numpy as jnp
import numpy as np
from jax import lax
from jax.experimental import pallas as pl
from jax.experimental.pallas import tpu as pltpu


def _fps_knn_kernel(table_ref, xt_ref, lc_ref, knn_ref, oh_ref, *, group_num, k_neighbors):
    """Processes a tile of Bt batch elements.

    table_ref : (Bt, N, Ppad)       packed [xyz | feat | 0-pad] gather table (lane-dense)
    xt_ref    : (Bt, 3, N)          xyz transposed (coordinate rows, lane-dense over N)
    lc_ref    : (Bt, G, Ppad)       packed sampled centres
    knn_ref   : (Bt, K*G, Ppad)     packed neighbours, row = t*G + g (t-major)
    oh_ref    : (Bt, (K+1)*G, N)    f32 scratch holding all one-hot selection rows
    """
    Bt, N, _ = table_ref.shape
    G = group_num
    K = k_neighbors

    table = table_ref[...].astype(jnp.float32)                 # (Bt, N, Ppad)
    xt = xt_ref[...].astype(jnp.float32)                       # (Bt, 3, N)
    xr = xt[:, 0, :]                                           # (Bt, N)
    yr = xt[:, 1, :]
    zr = xt[:, 2, :]

    iota_bn = lax.broadcasted_iota(jnp.int32, (Bt, N), 1)
    iota_bg = lax.broadcasted_iota(jnp.int32, (Bt, G), 1)
    iota_bgn = lax.broadcasted_iota(jnp.int32, (Bt, G, N), 2)

    # ---------------- Furthest point sampling (vectorized over Bt) ----------------
    # pointnet2 semantics: first sample is index 0; each step shrinks the running
    # min-distance with distances to the last selected point, then takes the argmax
    # (first index on ties).  1e10 init matches pointnet2's clamp.
    prev_row0 = (iota_bn == 0).astype(jnp.float32)             # (Bt, N) one-hot of point 0
    min_dist0 = jnp.full((Bt, N), 1e10, dtype=jnp.float32)
    idx0 = jnp.zeros((Bt, G), dtype=jnp.int32)                 # fps_idx[:, 0] = 0

    def fps_step(j, carry):
        min_dist, prev_row, idx_mat = carry
        # Coordinates of the previously selected point: ONE fused cross-lane reduce
        # over (Bt, 3, N) instead of three separate reductions (shortens the serial
        # XLU chain that bounds the FPS loop).  Exact {0,1}-masked sums.
        coords = jnp.sum(prev_row[:, None, :] * xt, axis=-1)    # (Bt, 3)
        sx = coords[:, 0:1]                                     # (Bt, 1)
        sy = coords[:, 1:2]
        sz = coords[:, 2:3]
        dx = xr - sx
        dy = yr - sy
        dz = zr - sz
        d = dx * dx + dy * dy + dz * dz                         # (Bt, N) pure VPU
        min_dist = jnp.minimum(min_dist, d)
        m = jnp.max(min_dist, axis=-1, keepdims=True)           # (Bt, 1)
        nxt = jnp.min(jnp.where(min_dist == m, iota_bn, N),
                      axis=-1, keepdims=True)                   # first argmax, (Bt, 1)
        new_row = (iota_bn == nxt).astype(jnp.float32)
        idx_mat = jnp.where(iota_bg == j, nxt, idx_mat)
        return (min_dist, new_row, idx_mat)

    _, _, fps_idx = lax.fori_loop(1, G, fps_step, (min_dist0, prev_row0, idx0))

    # One-hot rows for the FPS centres (rows 0..G-1 of the combined gather matrix),
    # built once with a single iota compare (no dynamic stores inside the serial loop).
    onehot = (iota_bgn == fps_idx[:, :, None]).astype(jnp.float32)   # (Bt, G, N)
    oh_ref[:, 0:G, :] = onehot

    # Exact centre coordinates on the VPU ({0,1}-masked sums): keeps self-distance
    # exactly 0 regardless of matmul precision.
    xrow = xr[:, None, :]                                       # (Bt, 1, N)
    yrow = yr[:, None, :]
    zrow = zr[:, None, :]
    cx = jnp.sum(onehot * xrow, axis=-1, keepdims=True)         # (Bt, G, 1)
    cy = jnp.sum(onehot * yrow, axis=-1, keepdims=True)
    cz = jnp.sum(onehot * zrow, axis=-1, keepdims=True)

    # ---------------- kNN grouping ----------------
    ddx = cx - xrow
    ddy = cy - yrow
    ddz = cz - zrow
    s_work = ddx * ddx + ddy * ddy + ddz * ddz                  # (Bt, G, N); self-dist == 0

    BIG = jnp.float32(1e30)
    for t in range(K):                                          # K static & small
        m = jnp.min(s_work, axis=-1, keepdims=True)             # (Bt, G, 1)
        idx = jnp.min(jnp.where(s_work == m, iota_bgn, N),
                      axis=-1, keepdims=True)                   # first argmin
        sel = (iota_bgn == idx).astype(jnp.float32)             # (Bt, G, N) one-hot
        oh_ref[:, (t + 1) * G:(t + 2) * G, :] = sel             # static row slab in scratch
        s_work = jnp.where(iota_bgn == idx, BIG, s_work)        # knock out chosen point

    # ONE batched gather matmul for centres + all K neighbour sets.
    # precision=HIGHEST keeps a {0,1}-row gather of an f32 table bit-exact.
    res = jnp.einsum('brn,bnp->brp', oh_ref[...], table,
                     preferred_element_type=jnp.float32,
                     precision=lax.Precision.HIGHEST)           # (Bt, (K+1)*G, Ppad)
    lc_ref[...] = res[:, 0:G, :].astype(lc_ref.dtype)
    knn_ref[...] = res[:, G:, :].astype(knn_ref.dtype)


def _default_batch_tile(B):
    # Prefer a grid of >= 2 steps (v7x has two TensorCores) while still amortizing the
    # serial FPS chain across batches in the sublane dim; for tiny B take all of it.
    if B >= 4 and B % 2 == 0:
        return B // 2
    return B


def fps_knn(xyz, x, group_num, k_neighbors, batch_tile=None):
    B, N, _ = xyz.shape
    C = x.shape[-1]
    G, K = group_num, k_neighbors
    assert x.shape[0] == B and x.shape[1] == N
    assert G <= N and K <= N, "group_num / k_neighbors must not exceed N"
    P = 3 + C
    Ppad = ((P + 127) // 128) * 128          # lane-dense packed width (multiple of 128)

    Bt = _default_batch_tile(B) if batch_tile is None else batch_tile
    assert B % Bt == 0, "batch_tile must divide the batch size"

    xyz_f = xyz.astype(jnp.float32)
    x_f = x.astype(jnp.float32)
    parts = [xyz_f, x_f]
    if Ppad > P:
        parts.append(jnp.zeros((B, N, Ppad - P), dtype=jnp.float32))
    table = jnp.concatenate(parts, axis=-1)                     # (B, N, Ppad)
    xt = jnp.transpose(xyz_f, (0, 2, 1))                        # (B, 3, N) lane-dense rows

    kernel = functools.partial(_fps_knn_kernel, group_num=G, k_neighbors=K)

    out_shape = (
        jax.ShapeDtypeStruct((B, G, Ppad), jnp.float32),
        jax.ShapeDtypeStruct((B, K * G, Ppad), jnp.float32),
    )

    grid_spec = pltpu.PrefetchScalarGridSpec(
        num_scalar_prefetch=0,
        grid=(B // Bt,),
        in_specs=[
            pl.BlockSpec((Bt, N, Ppad), lambda b: (b, 0, 0)),
            pl.BlockSpec((Bt, 3, N), lambda b: (b, 0, 0)),
        ],
        out_specs=(
            pl.BlockSpec((Bt, G, Ppad), lambda b: (b, 0, 0)),
            pl.BlockSpec((Bt, K * G, Ppad), lambda b: (b, 0, 0)),
        ),
        scratch_shapes=[pltpu.VMEM((Bt, (K + 1) * G, N), jnp.float32)],
    )

    lc_packed, knn_packed = pl.pallas_call(
        kernel,
        out_shape=out_shape,
        grid_spec=grid_spec,
        compiler_params=pltpu.CompilerParams(dimension_semantics=("parallel",)),
    )(table, xt)

    # Pure layout glue in the wrapper (all minor dims are 128-lane dense, so XLA fuses
    # the transpose with the channel slicing): split packed slabs, (B,K,G,*) -> (B,G,K,*).
    lc_xyz = lc_packed[..., :3].astype(xyz.dtype)
    lc_x = lc_packed[..., 3:P].astype(x.dtype)
    knn = knn_packed.reshape(B, K, G, Ppad).transpose(0, 2, 1, 3)
    knn_xyz = knn[..., :3].astype(xyz.dtype)
    knn_x = knn[..., 3:P].astype(x.dtype)
    return lc_xyz, lc_x, knn_xyz, knn_x


if __name__ == "__main__":
    B, N, C = 2, 64, 8
    GROUP_NUM, K_NEIGHBORS = 16, 4   # FPS_kNN(group_num=16, k_neighbors=4)

    key = jax.random.PRNGKey(0)
    k1, k2 = jax.random.split(key)
    xyz = jax.random.uniform(k1, (B, N, 3), dtype=jnp.float32)
    x = jax.random.normal(k2, (B, N, C), dtype=jnp.float32)

    outs = fps_knn(xyz, x, GROUP_NUM, K_NEIGHBORS)
    outs = jax.block_until_ready(outs)
    lc_xyz, lc_x, knn_xyz, knn_x = [np.asarray(o) for o in outs]
    xyz_np, x_np = np.asarray(xyz), np.asarray(x)

    # --- structural / semantic sanity checks ---
    assert lc_xyz.shape == (B, GROUP_NUM, 3)
    assert lc_x.shape == (B, GROUP_NUM, C)
    assert knn_xyz.shape == (B, GROUP_NUM, K_NEIGHBORS, 3)
    assert knn_x.shape == (B, GROUP_NUM, K_NEIGHBORS, C)

    # pointnet2 FPS convention: first sampled point is index 0
    assert np.allclose(lc_xyz[:, 0, :], xyz_np[:, 0, :], atol=1e-6)
    # nearest neighbour of each centre is the centre itself
    assert np.allclose(knn_xyz[:, :, 0, :], lc_xyz, atol=1e-6)

    def nearest_row(points, target):
        d = np.max(np.abs(points - target[None, :]), axis=-1)
        i = int(np.argmin(d))
        return i, float(d[i])

    for b in range(B):
        # sampled centres are distinct input points
        assert np.unique(np.round(lc_xyz[b], 5), axis=0).shape[0] == GROUP_NUM
        for g in range(GROUP_NUM):
            i, err = nearest_row(xyz_np[b], lc_xyz[b, g])
            assert err < 1e-5
            assert np.allclose(lc_x[b, g], x_np[b, i], atol=1e-5)

            true_d = np.sum((xyz_np[b] - lc_xyz[b, g][None, :]) ** 2, axis=-1)
            kth = np.sort(true_d)[K_NEIGHBORS - 1]
            prev = -np.inf
            for t in range(K_NEIGHBORS):
                j, errj = nearest_row(xyz_np[b], knn_xyz[b, g, t])
                assert errj < 1e-5
                # xyz / feature pairing is consistent with an actual input point
                assert np.allclose(knn_x[b, g, t], x_np[b, j], atol=1e-5)
                # the gathered neighbours really are among the K closest points
                assert true_d[j] <= kth + 1e-5
                # and are returned in (approximately) ascending distance order
                assert true_d[j] >= prev - 1e-5
                prev = true_d[j]

    print("KERNEL_OK")
</pallas_src>

<mosaic_0001>
module attributes {stable_mosaic.version = 11 : i64} {
  func.func @_fps_knn_kernel(%arg0: i32, %arg1: memref<2x64x128xf32, #tpu.memory_space<vmem>>, %arg2: memref<2x3x64xf32, #tpu.memory_space<vmem>>, %arg3: memref<2x16x128xf32, #tpu.memory_space<vmem>>, %arg4: memref<2x64x128xf32, #tpu.memory_space<vmem>>, %arg5: memref<2x80x64xf32, #tpu.memory_space<vmem>>) attributes {dimension_semantics = [#tpu.dimension_semantics<parallel>], iteration_bounds = array<i64: 1>, scalar_prefetch = 0 : i64, scratch_operands = 1 : i64, tpu.core_type = #tpu.core_type<tc>, window_params = [{transform_indices = @transform_0, window_bounds = array<i64: 2, 64, 128>}, {transform_indices = @transform_1, window_bounds = array<i64: 2, 3, 64>}, {transform_indices = @transform_2, window_bounds = array<i64: 2, 16, 128>}, {transform_indices = @transform_3, window_bounds = array<i64: 2, 64, 128>}]} {
    %c0 = arith.constant 0 : index
    %c0_0 = arith.constant 0 : index
    %c0_1 = arith.constant 0 : index
    %0 = vector.load %arg1[%c0, %c0_0, %c0_1] : memref<2x64x128xf32, #tpu.memory_space<vmem>>, vector<2x64x128xf32>
    %c0_2 = arith.constant 0 : index
    %c0_3 = arith.constant 0 : index
    %c0_4 = arith.constant 0 : index
    %1 = vector.load %arg2[%c0_2, %c0_3, %c0_4] : memref<2x3x64xf32, #tpu.memory_space<vmem>>, vector<2x3x64xf32>
    %2 = vector.extract_strided_slice %1 {offsets = [0, 0, 0], sizes = [2, 1, 64], strides = [1, 1, 1]} : vector<2x3x64xf32> to vector<2x1x64xf32>
    %3 = vector.shape_cast %2 : vector<2x1x64xf32> to vector<2x64xf32>
    %4 = vector.extract_strided_slice %1 {offsets = [0, 1, 0], sizes = [2, 1, 64], strides = [1, 1, 1]} : vector<2x3x64xf32> to vector<2x1x64xf32>
    %5 = vector.shape_cast %4 : vector<2x1x64xf32> to vector<2x64xf32>
    %6 = vector.extract_strided_slice %1 {offsets = [0, 2, 0], sizes = [2, 1, 64], strides = [1, 1, 1]} : vector<2x3x64xf32> to vector<2x1x64xf32>
    %7 = vector.shape_cast %6 : vector<2x1x64xf32> to vector<2x64xf32>
    %8 = tpu.iota {dimensions = array<i32: 1>} : vector<2x64xi32>
    %9 = tpu.iota {dimensions = array<i32: 1>} : vector<2x16xi32>
    %10 = tpu.iota {dimensions = array<i32: 2>} : vector<2x16x64xi32>
    %c0_i32 = arith.constant 0 : i32
    %11 = vector.broadcast %c0_i32 : i32 to vector<2x64xi32>
    %12 = arith.cmpi eq, %8, %11 : vector<2x64xi32>
    %13 = arith.extui %12 : vector<2x64xi1> to vector<2x64xi32>
    %14 = arith.sitofp %13 : vector<2x64xi32> to vector<2x64xf32>
    %cst = arith.constant 1.000000e+10 : f32
    %15 = vector.broadcast %cst : f32 to vector<2x64xf32>
    %c0_i32_5 = arith.constant 0 : i32
    %16 = vector.broadcast %c0_i32_5 : i32 to vector<2x16xi32>
    %c1_i32 = arith.constant 1 : i32
    %c15_i32 = arith.constant 15 : i32
    %17 = arith.addi %c1_i32, %c15_i32 : i32
    %c1_i32_6 = arith.constant 1 : i32
    %18:3 = scf.for %arg6 = %c1_i32 to %17 step %c1_i32_6 iter_args(%arg7 = %15, %arg8 = %14, %arg9 = %16) -> (vector<2x64xf32>, vector<2x64xf32>, vector<2x16xi32>)  : i32 {
      %124 = vector.shape_cast %arg8 : vector<2x64xf32> to vector<2x1x64xf32>
      %125 = vector.broadcast %124 : vector<2x1x64xf32> to vector<2x3x64xf32>
      %126 = arith.mulf %125, %1 : vector<2x3x64xf32>
      %cst_46 = arith.constant dense<0.000000e+00> : vector<2x3xf32>
      %127 = vector.multi_reduction <add>, %126, %cst_46 [2] : vector<2x3x64xf32> to vector<2x3xf32>
      %128 = vector.extract_strided_slice %127 {offsets = [0, 0], sizes = [2, 1], strides = [1, 1]} : vector<2x3xf32> to vector<2x1xf32>
      %129 = vector.extract_strided_slice %127 {offsets = [0, 1], sizes = [2, 1], strides = [1, 1]} : vector<2x3xf32> to vector<2x1xf32>
      %130 = vector.extract_strided_slice %127 {offsets = [0, 2], sizes = [2, 1], strides = [1, 1]} : vector<2x3xf32> to vector<2x1xf32>
      %131 = vector.broadcast %128 : vector<2x1xf32> to vector<2x64xf32>
      %132 = arith.subf %3, %131 : vector<2x64xf32>
      %133 = vector.broadcast %129 : vector<2x1xf32> to vector<2x64xf32>
      %134 = arith.subf %5, %133 : vector<2x64xf32>
      %135 = vector.broadcast %130 : vector<2x1xf32> to vector<2x64xf32>
      %136 = arith.subf %7, %135 : vector<2x64xf32>
      %137 = arith.mulf %132, %132 : vector<2x64xf32>
      %138 = arith.mulf %134, %134 : vector<2x64xf32>
      %139 = arith.addf %137, %138 : vector<2x64xf32>
      %140 = arith.mulf %136, %136 : vector<2x64xf32>
      %141 = arith.addf %139, %140 : vector<2x64xf32>
      %142 = arith.minimumf %arg7, %141 : vector<2x64xf32>
      %cst_47 = arith.constant dense<0xFF800000> : vector<2xf32>
      %143 = vector.multi_reduction <maximumf>, %142, %cst_47 [1] : vector<2x64xf32> to vector<2xf32>
      %144 = vector.shape_cast %143 : vector<2xf32> to vector<2x1xf32>
      %145 = vector.broadcast %144 : vector<2x1xf32> to vector<2x64xf32>
      %146 = arith.cmpf oeq, %142, %145 : vector<2x64xf32>
      %c64_i32_48 = arith.constant 64 : i32
      %147 = vector.broadcast %c64_i32_48 : i32 to vector<2x64xi32>
      %148 = arith.select %146, %8, %147 : vector<2x64xi1>, vector<2x64xi32>
      %cst_49 = arith.constant dense<2147483647> : vector<2xi32>
      %149 = vector.multi_reduction <minsi>, %148, %cst_49 [1] : vector<2x64xi32> to vector<2xi32>
      %150 = vector.shape_cast %149 : vector<2xi32> to vector<2x1xi32>
      %151 = vector.broadcast %150 : vector<2x1xi32> to vector<2x64xi32>
      %152 = arith.cmpi eq, %8, %151 : vector<2x64xi32>
      %153 = arith.extui %152 : vector<2x64xi1> to vector<2x64xi32>
      %154 = arith.sitofp %153 : vector<2x64xi32> to vector<2x64xf32>
      %155 = vector.broadcast %arg6 : i32 to vector<2x16xi32>
      %156 = arith.cmpi eq, %9, %155 : vector<2x16xi32>
      %157 = vector.shape_cast %150 : vector<2x1xi32> to vector<2x1xi32>
      %158 = vector.broadcast %157 : vector<2x1xi32> to vector<2x16xi32>
      %159 = arith.select %156, %158, %arg9 : vector<2x16xi1>, vector<2x16xi32>
      scf.yield %142, %154, %159 : vector<2x64xf32>, vector<2x64xf32>, vector<2x16xi32>
    }
    %c15_i32_7 = arith.constant 15 : i32
    %19 = vector.shape_cast %18#2 : vector<2x16xi32> to vector<2x16x1xi32>
    %20 = vector.broadcast %19 : vector<2x16x1xi32> to vector<2x16x64xi32>
    %21 = arith.cmpi eq, %10, %20 : vector<2x16x64xi32>
    %22 = arith.extui %21 : vector<2x16x64xi1> to vector<2x16x64xi32>
    %23 = arith.sitofp %22 : vector<2x16x64xi32> to vector<2x16x64xf32>
    %c0_8 = arith.constant 0 : index
    %c0_9 = arith.constant 0 : index
    %c0_10 = arith.constant 0 : index
    %24 = vector.load %arg5[%c0_8, %c0_9, %c0_10] : memref<2x80x64xf32, #tpu.memory_space<vmem>>, vector<2x16x64xf32>
    tpu.vector_store %arg5[%c0_8, %c0_9, %c0_10], %23 {strides = array<i32>} : memref<2x80x64xf32, #tpu.memory_space<vmem>>, vector<2x16x64xf32>,
    %25 = vector.shape_cast %3 : vector<2x64xf32> to vector<2x1x64xf32>
    %26 = vector.shape_cast %5 : vector<2x64xf32> to vector<2x1x64xf32>
    %27 = vector.shape_cast %7 : vector<2x64xf32> to vector<2x1x64xf32>
    %28 = vector.broadcast %25 : vector<2x1x64xf32> to vector<2x16x64xf32>
    %29 = arith.mulf %23, %28 : vector<2x16x64xf32>
    %cst_11 = arith.constant dense<0.000000e+00> : vector<2x16xf32>
    %30 = vector.multi_reduction <add>, %29, %cst_11 [2] : vector<2x16x64xf32> to vector<2x16xf32>
    %31 = vector.shape_cast %30 : vector<2x16xf32> to vector<2x16x1xf32>
    %32 = vector.broadcast %26 : vector<2x1x64xf32> to vector<2x16x64xf32>
    %33 = arith.mulf %23, %32 : vector<2x16x64xf32>
    %cst_12 = arith.constant dense<0.000000e+00> : vector<2x16xf32>
    %34 = vector.multi_reduction <add>, %33, %cst_12 [2] : vector<2x16x64xf32> to vector<2x16xf32>
    %35 = vector.shape_cast %34 : vector<2x16xf32> to vector<2x16x1xf32>
    %36 = vector.broadcast %27 : vector<2x1x64xf32> to vector<2x16x64xf32>
    %37 = arith.mulf %23, %36 : vector<2x16x64xf32>
    %cst_13 = arith.constant dense<0.000000e+00> : vector<2x16xf32>
    %38 = vector.multi_reduction <add>, %37, %cst_13 [2] : vector<2x16x64xf32> to vector<2x16xf32>
    %39 = vector.shape_cast %38 : vector<2x16xf32> to vector<2x16x1xf32>
    %40 = vector.broadcast %31 : vector<2x16x1xf32> to vector<2x16x64xf32>
    %41 = vector.broadcast %25 : vector<2x1x64xf32> to vector<2x16x64xf32>
    %42 = arith.subf %40, %41 : vector<2x16x64xf32>
    %43 = vector.broadcast %35 : vector<2x16x1xf32> to vector<2x16x64xf32>
    %44 = vector.broadcast %26 : vector<2x1x64xf32> to vector<2x16x64xf32>
    %45 = arith.subf %43, %44 : vector<2x16x64xf32>
    %46 = vector.broadcast %39 : vector<2x16x1xf32> to vector<2x16x64xf32>
    %47 = vector.broadcast %27 : vector<2x1x64xf32> to vector<2x16x64xf32>
    %48 = arith.subf %46, %47 : vector<2x16x64xf32>
    %49 = arith.mulf %42, %42 : vector<2x16x64xf32>
    %50 = arith.mulf %45, %45 : vector<2x16x64xf32>
    %51 = arith.addf %49, %50 : vector<2x16x64xf32>
    %52 = arith.mulf %48, %48 : vector<2x16x64xf32>
    %53 = arith.addf %51, %52 : vector<2x16x64xf32>
    %cst_14 = arith.constant dense<0x7F800000> : vector<2x16xf32>
    %54 = vector.multi_reduction <minimumf>, %53, %cst_14 [2] : vector<2x16x64xf32> to vector<2x16xf32>
    %55 = vector.shape_cast %54 : vector<2x16xf32> to vector<2x16x1xf32>
    %56 = vector.broadcast %55 : vector<2x16x1xf32> to vector<2x16x64xf32>
    %57 = arith.cmpf oeq, %53, %56 : vector<2x16x64xf32>
    %c64_i32 = arith.constant 64 : i32
    %58 = vector.broadcast %c64_i32 : i32 to vector<2x16x64xi32>
    %59 = arith.select %57, %10, %58 : vector<2x16x64xi1>, vector<2x16x64xi32>
    %cst_15 = arith.constant dense<2147483647> : vector<2x16xi32>
    %60 = vector.multi_reduction <minsi>, %59, %cst_15 [2] : vector<2x16x64xi32> to vector<2x16xi32>
    %61 = vector.shape_cast %60 : vector<2x16xi32> to vector<2x16x1xi32>
    %62 = vector.broadcast %61 : vector<2x16x1xi32> to vector<2x16x64xi32>
    %63 = arith.cmpi eq, %10, %62 : vector<2x16x64xi32>
    %64 = arith.extui %63 : vector<2x16x64xi1> to vector<2x16x64xi32>
    %65 = arith.sitofp %64 : vector<2x16x64xi32> to vector<2x16x64xf32>
    %c0_16 = arith.constant 0 : index
    %c16 = arith.constant 16 : index
    %c0_17 = arith.constant 0 : index
    %66 = vector.load %arg5[%c0_16, %c16, %c0_17] : memref<2x80x64xf32, #tpu.memory_space<vmem>>, vector<2x16x64xf32>
    tpu.vector_store %arg5[%c0_16, %c16, %c0_17], %65 {strides = array<i32>} : memref<2x80x64xf32, #tpu.memory_space<vmem>>, vector<2x16x64xf32>,
    %67 = vector.broadcast %61 : vector<2x16x1xi32> to vector<2x16x64xi32>
    %68 = arith.cmpi eq, %10, %67 : vector<2x16x64xi32>
    %cst_18 = arith.constant 1.000000e+30 : f32
    %69 = vector.broadcast %cst_18 : f32 to vector<2x16x64xf32>
    %70 = arith.select %68, %69, %53 : vector<2x16x64xi1>, vector<2x16x64xf32>
    %cst_19 = arith.constant dense<0x7F800000> : vector<2x16xf32>
    %71 = vector.multi_reduction <minimumf>, %70, %cst_19 [2] : vector<2x16x64xf32> to vector<2x16xf32>
    %72 = vector.shape_cast %71 : vector<2x16xf32> to vector<2x16x1xf32>
    %73 = vector.broadcast %72 : vector<2x16x1xf32> to vector<2x16x64xf32>
    %74 = arith.cmpf oeq, %70, %73 : vector<2x16x64xf32>
    %c64_i32_20 = arith.constant 64 : i32
    %75 = vector.broadcast %c64_i32_20 : i32 to vector<2x16x64xi32>
    %76 = arith.select %74, %10, %75 : vector<2x16x64xi1>, vector<2x16x64xi32>
    %cst_21 = arith.constant dense<2147483647> : vector<2x16xi32>
    %77 = vector.multi_reduction <minsi>, %76, %cst_21 [2] : vector<2x16x64xi32> to vector<2x16xi32>
    %78 = vector.shape_cast %77 : vector<2x16xi32> to vector<2x16x1xi32>
    %79 = vector.broadcast %78 : vector<2x16x1xi32> to vector<2x16x64xi32>
    %80 = arith.cmpi eq, %10, %79 : vector<2x16x64xi32>
    %81 = arith.extui %80 : vector<2x16x64xi1> to vector<2x16x64xi32>
    %82 = arith.sitofp %81 : vector<2x16x64xi32> to vector<2x16x64xf32>
    %c0_22 = arith.constant 0 : index
    %c32 = arith.constant 32 : index
    %c0_23 = arith.constant 0 : index
    %83 = vector.load %arg5[%c0_22, %c32, %c0_23] : memref<2x80x64xf32, #tpu.memory_space<vmem>>, vector<2x16x64xf32>
    tpu.vector_store %arg5[%c0_22, %c32, %c0_23], %82 {strides = array<i32>} : memref<2x80x64xf32, #tpu.memory_space<vmem>>, vector<2x16x64xf32>,
    %84 = vector.broadcast %78 : vector<2x16x1xi32> to vector<2x16x64xi32>
    %85 = arith.cmpi eq, %10, %84 : vector<2x16x64xi32>
    %cst_24 = arith.constant 1.000000e+30 : f32
    %86 = vector.broadcast %cst_24 : f32 to vector<2x16x64xf32>
    %87 = arith.select %85, %86, %70 : vector<2x16x64xi1>, vector<2x16x64xf32>
    %cst_25 = arith.constant dense<0x7F800000> : vector<2x16xf32>
    %88 = vector.multi_reduction <minimumf>, %87, %cst_25 [2] : vector<2x16x64xf32> to vector<2x16xf32>
    %89 = vector.shape_cast %88 : vector<2x16xf32> to vector<2x16x1xf32>
    %90 = vector.broadcast %89 : vector<2x16x1xf32> to vector<2x16x64xf32>
    %91 = arith.cmpf oeq, %87, %90 : vector<2x16x64xf32>
    %c64_i32_26 = arith.constant 64 : i32
    %92 = vector.broadcast %c64_i32_26 : i32 to vector<2x16x64xi32>
    %93 = arith.select %91, %10, %92 : vector<2x16x64xi1>, vector<2x16x64xi32>
    %cst_27 = arith.constant dense<2147483647> : vector<2x16xi32>
    %94 = vector.multi_reduction <minsi>, %93, %cst_27 [2] : vector<2x16x64xi32> to vector<2x16xi32>
    %95 = vector.shape_cast %94 : vector<2x16xi32> to vector<2x16x1xi32>
    %96 = vector.broadcast %95 : vector<2x16x1xi32> to vector<2x16x64xi32>
    %97 = arith.cmpi eq, %10, %96 : vector<2x16x64xi32>
    %98 = arith.extui %97 : vector<2x16x64xi1> to vector<2x16x64xi32>
    %99 = arith.sitofp %98 : vector<2x16x64xi32> to vector<2x16x64xf32>
    %c0_28 = arith.constant 0 : index
    %c48 = arith.constant 48 : index
    %c0_29 = arith.constant 0 : index
    %100 = vector.load %arg5[%c0_28, %c48, %c0_29] : memref<2x80x64xf32, #tpu.memory_space<vmem>>, vector<2x16x64xf32>
    tpu.vector_store %arg5[%c0_28, %c48, %c0_29], %99 {strides = array<i32>} : memref<2x80x64xf32, #tpu.memory_space<vmem>>, vector<2x16x64xf32>,
    %101 = vector.broadcast %95 : vector<2x16x1xi32> to vector<2x16x64xi32>
    %102 = arith.cmpi eq, %10, %101 : vector<2x16x64xi32>
    %cst_30 = arith.constant 1.000000e+30 : f32
    %103 = vector.broadcast %cst_30 : f32 to vector<2x16x64xf32>
    %104 = arith.select %102, %103, %87 : vector<2x16x64xi1>, vector<2x16x64xf32>
    %cst_31 = arith.constant dense<0x7F800000> : vector<2x16xf32>
    %105 = vector.multi_reduction <minimumf>, %104, %cst_31 [2] : vector<2x16x64xf32> to vector<2x16xf32>
    %106 = vector.shape_cast %105 : vector<2x16xf32> to vector<2x16x1xf32>
    %107 = vector.broadcast %106 : vector<2x16x1xf32> to vector<2x16x64xf32>
    %108 = arith.cmpf oeq, %104, %107 : vector<2x16x64xf32>
    %c64_i32_32 = arith.constant 64 : i32
    %109 = vector.broadcast %c64_i32_32 : i32 to vector<2x16x64xi32>
    %110 = arith.select %108, %10, %109 : vector<2x16x64xi1>, vector<2x16x64xi32>
    %cst_33 = arith.constant dense<2147483647> : vector<2x16xi32>
    %111 = vector.multi_reduction <minsi>, %110, %cst_33 [2] : vector<2x16x64xi32> to vector<2x16xi32>
    %112 = vector.shape_cast %111 : vector<2x16xi32> to vector<2x16x1xi32>
    %113 = vector.broadcast %112 : vector<2x16x1xi32> to vector<2x16x64xi32>
    %114 = arith.cmpi eq, %10, %113 : vector<2x16x64xi32>
    %115 = arith.extui %114 : vector<2x16x64xi1> to vector<2x16x64xi32>
    %116 = arith.sitofp %115 : vector<2x16x64xi32> to vector<2x16x64xf32>
    %c0_34 = arith.constant 0 : index
    %c64 = arith.constant 64 : index
    %c0_35 = arith.constant 0 : index
    %117 = vector.load %arg5[%c0_34, %c64, %c0_35] : memref<2x80x64xf32, #tpu.memory_space<vmem>>, vector<2x16x64xf32>
    tpu.vector_store %arg5[%c0_34, %c64, %c0_35], %116 {strides = array<i32>} : memref<2x80x64xf32, #tpu.memory_space<vmem>>, vector<2x16x64xf32>,
    %c0_36 = arith.constant 0 : index
    %c0_37 = arith.constant 0 : index
    %c0_38 = arith.constant 0 : index
    %118 = vector.load %arg5[%c0_36, %c0_37, %c0_38] : memref<2x80x64xf32, #tpu.memory_space<vmem>>, vector<2x80x64xf32>
    "tpu.trace_start"() <{level = 10 : i32, message = "brn,bnp->brp"}> : () -> ()
    %cst_39 = arith.constant dense<0.000000e+00> : vector<2x80x128xf32>
    %119 = tpu.matmul %118, %0, %cst_39 {dimension_numbers = #tpu.dot_dimension_numbers<[2], [1], [1], [2], [0, 0, 0, 1, 1, 2], [0], [0]>, precision = #tpu.contract_precision<fp32>} : vector<2x80x64xf32>, vector<2x64x128xf32>, vector<2x80x128xf32> -> vector<2x80x128xf32>
    "tpu.trace_stop"() : () -> ()
    %120 = vector.extract_strided_slice %119 {offsets = [0, 0, 0], sizes = [2, 16, 128], strides = [1, 1, 1]} : vector<2x80x128xf32> to vector<2x16x128xf32>
    %c0_40 = arith.constant 0 : index
    %c0_41 = arith.constant 0 : index
    %c0_42 = arith.constant 0 : index
    %121 = vector.load %arg3[%c0_40, %c0_41, %c0_42] : memref<2x16x128xf32, #tpu.memory_space<vmem>>, vector<2x16x128xf32>
    tpu.vector_store %arg3[%c0_40, %c0_41, %c0_42], %120 {strides = array<i32>} : memref<2x16x128xf32, #tpu.memory_space<vmem>>, vector<2x16x128xf32>,
    %122 = vector.extract_strided_slice %119 {offsets = [0, 16, 0], sizes = [2, 64, 128], strides = [1, 1, 1]} : vector<2x80x128xf32> to vector<2x64x128xf32>
    %c0_43 = arith.constant 0 : index
    %c0_44 = arith.constant 0 : index
    %c0_45 = arith.constant 0 : index
    %123 = vector.load %arg4[%c0_43, %c0_44, %c0_45] : memref<2x64x128xf32, #tpu.memory_space<vmem>>, vector<2x64x128xf32>
    tpu.vector_store %arg4[%c0_43, %c0_44, %c0_45], %122 {strides = array<i32>} : memref<2x64x128xf32, #tpu.memory_space<vmem>>, vector<2x64x128xf32>,
    return
  }
  func.func @transform_0(%arg0: i32) -> (i32, i32, i32) {
    %c0_i32 = arith.constant 0 : i32
    %c0_i32_0 = arith.constant 0 : i32
    %c0_i32_1 = arith.constant 0 : i32
    return %arg0, %c0_i32, %c0_i32_0 : i32, i32, i32
  }
  func.func @transform_1(%arg0: i32) -> (i32, i32, i32) {
    %c0_i32 = arith.constant 0 : i32
    %c0_i32_0 = arith.constant 0 : i32
    %c0_i32_1 = arith.constant 0 : i32
    return %arg0, %c0_i32, %c0_i32_0 : i32, i32, i32
  }
  func.func @transform_2(%arg0: i32) -> (i32, i32, i32) {
    %c0_i32 = arith.constant 0 : i32
    %c0_i32_0 = arith.constant 0 : i32
    %c0_i32_1 = arith.constant 0 : i32
    return %arg0, %c0_i32, %c0_i32_0 : i32, i32, i32
  }
  func.func @transform_3(%arg0: i32) -> (i32, i32, i32) {
    %c0_i32 = arith.constant 0 : i32
    %c0_i32_0 = arith.constant 0 : i32
    %c0_i32_1 = arith.constant 0 : i32
    return %arg0, %c0_i32, %c0_i32_0 : i32, i32, i32
  }
}

</mosaic_0001>

<llo_original>
// kernel: tpu_custom_call.1
$region0: #{tpu_custom_call.1}
  #allocation0 [shape = 'u32[]', space=smem, size = 0x4, offset = 0x4, fixed_abs, tag = 'smem constant byte address 0x4 - core index']
  #allocation1 [shape = 'u32[144,128]{1,0:T(1,128)}', space=vmem, size = 0x12000, scoped, tag = 'internal scratch']
  #allocation2 [shape = 'f32[2,80,64]{2,1,0:T(8,128)}', space=vmem, size = 0x14000, scoped, tag = 'scratch operand']
  %s0 = inlined_call_operand.hbm [shape: f32[2,64,128], index: 0, kind: input, shape index: {}]
  %s1 = inlined_call_operand.vmem [shape: f32[2,3,64], index: 1, kind: input, shape index: {}]
  %s2 = inlined_call_operand.hbm [shape: f32[2,16,128], index: 2, kind: output, shape index: {0}]
  %s3 = inlined_call_operand.hbm [shape: f32[2,64,128], index: 3, kind: output, shape index: {1}]
  %4 = xla_tuple %s2, %s3
  %s5 = sld [smem:[#allocation0]]
  $region37: #{tpu_custom_call.1} parent=0
    _
  %s7 = ssub.s32 1, %s5
  %s8 = scalar_select 0, %s7, %s5
  $region1: #{tpu_custom_call.1} parent=0
    #allocation3 [shape = 'u8[65536]{0}', space=vmem, size = 0x10000, scoped, tag = 'input window, operand 0, single buffered']
    #allocation4 [shape = 's32[1]{0}', space=sflag, size = 0x4, scoped, tag = 'scoped memory for tpu_custom_call.1']
    #allocation5 [shape = 's32[1]{0}', space=sflag, size = 0x4, scoped, tag = 'scoped memory for tpu_custom_call.1']
    #allocation6 [shape = 'u8[16384]{0}', space=vmem, size = 0x4000, scoped, tag = 'output window, operand 0, single buffered']
    #allocation7 [shape = 'u8[65536]{0}', space=vmem, size = 0x10000, scoped, tag = 'output window, operand 1, single buffered']
    #allocation8 [shape = 's32[1]{0}', space=sflag, size = 0x4, scoped, tag = 'scoped memory for tpu_custom_call.1']
    %9 = vsyncpa [#allocation4], 0
    %10 = vsyncpa [#allocation5], 0
    %11 = vsyncpa [#allocation8], 0
    // Predicated region
    $region2: #{tpu_custom_call.1} parent=1 // pred_check
      _
    $region3: #{tpu_custom_call.1} parent=1 // pred_check_branch
      %13 = sbr.rel (0) target = $region5
    $region4: #{tpu_custom_call.1} parent=1 // pred_region
      %s15 = ssub.s32 2048, 2048
      %16 = vsyncadd [#allocation4], %s15
      %s17 = sshll.u32 [#allocation3], 4
      %s18 = int_to_ptr.vmem [resolvable:$true] %s17
      %23 = dma.hbm_to_vmem [thread:$0]  %s0, 2048, %s18, [#allocation4], 128, 128, 8
    $region5: #{tpu_custom_call.1} parent=1 // pred_fallthru
      _
    // Predicated region
    $region6: #{tpu_custom_call.1} parent=1 // pred_check
      _
    $region7: #{tpu_custom_call.1} parent=1 // pred_check_branch
      %25 = sbr.rel (0) target = $region9
    $region8: #{tpu_custom_call.1} parent=1 // pred_region
      _
    $region9: #{tpu_custom_call.1} parent=1 // pred_fallthru
      _
    // Predicated region
    $region10: #{tpu_custom_call.1} parent=1 // pred_check
      _
    $region11: #{tpu_custom_call.1} parent=1 // pred_check_branch
      %27 = sbr.rel (0) target = $region13
    $region12: #{tpu_custom_call.1} parent=1 // pred_region
      %28 = dma.done [#allocation4], 2048
    $region13: #{tpu_custom_call.1} parent=1 // pred_fallthru
      _
    %v29 = vld [vmem:[#allocation3] sm:$0xff]
    %v30 = vld [vmem:[#allocation3 + $0x8] sm:$0xff]
    %v31 = vld [vmem:[#allocation3 + $0x10] sm:$0xff]
    %v32 = vld [vmem:[#allocation3 + $0x18] sm:$0xff]
    %v33 = vld [vmem:[#allocation3 + $0x20] sm:$0xff]
    %v34 = vld [vmem:[#allocation3 + $0x28] sm:$0xff]
    %v35 = vld [vmem:[#allocation3 + $0x30] sm:$0xff]
    %v36 = vld [vmem:[#allocation3 + $0x38] sm:$0xff]
    %v37 = vld [vmem:[#allocation3 + $0x40] sm:$0xff]
    %v38 = vld [vmem:[#allocation3 + $0x48] sm:$0xff]
    %v39 = vld [vmem:[#allocation3 + $0x50] sm:$0xff]
    %v40 = vld [vmem:[#allocation3 + $0x58] sm:$0xff]
    %v41 = vld [vmem:[#allocation3 + $0x60] sm:$0xff]
    %v42 = vld [vmem:[#allocation3 + $0x68] sm:$0xff]
    %v43 = vld [vmem:[#allocation3 + $0x70] sm:$0xff]
    %v44 = vld [vmem:[#allocation3 + $0x78] sm:$0xff]
    %v45 = vld [vmem:[%s1] sm:$0x7]
    %v46 = vld [vmem:[%s1 + $0x4] sm:$0x7]
    %v47 = vlaneseq
    %v48 = vand.u32 %v47, 127
    %vm49 = vcmp.eq.s32.totalorder %v48, 0
    %v50 = vsel %vm49, 1, 0
    %v51 = vcvt.s32.f32 %v50
    loop: start=1, step=1, limit=16
    $region14: #{tpu_custom_call.1} parent=1 // loop_pre_header
      _
    $region15: #{tpu_custom_call.1} parent=1 // loop_header
      %s53 = sphi 1, %s57
      %p54 = scmp.ge.s32.totalorder %s53, 16
      %v58 = vphi 1e+10, %v156
      %v59 = vphi 1e+10, %v157
      %v60 = vphi %v51, %v195
      %v61 = vphi 0, %v198
    $region16: #{tpu_custom_call.1} parent=1 // loop_header_branch
      %56 = sbr.rel (%p54) target = $region20
    $region17: #{tpu_custom_call.1} parent=1 // loop_body
      %v64 = vunpack.c.l.s4 1966171168
      %v65 = vunpack.c.0.s8 %v64
      %v66 = vlaneseq
      %v67 = vshrl.u32 %v66, 7
      %v68 = vsub.s32 %v65, %v67
      %v69 = vrot.slane %v60, %v68
      %v70 = vcombine.high %v69, %v69
      %v72 = vunpack.c.l.s4 1966171168
      %v73 = vunpack.c.0.s8 %v72
      %v74 = vlaneseq
      %v75 = vshrl.u32 %v74, 7
      %v76 = vsub.s32 %v73, %v75
      %v77 = vrot.slane %v69, %v76
      %v79 = vunpack.c.l.s4 1966171168
      %v80 = vunpack.c.0.s8 %v79
      %v81 = vlaneseq
      %v82 = vshrl.u32 %v81, 7
      %v83 = vsub.s32 %v80, %v82
      %v84 = vrot.slane %v70, %v83
      %v85 = vlaneseq
      %v86 = vshrl.u32 %v85, 7
      %v87 = vsub.s32 0, %v86
      %v88 = vrot.slane %v77, %v87
      %v89 = vlaneseq
      %v90 = vshrl.u32 %v89, 7
      %v91 = vsub.s32 0, %v90
      %v92 = vrot.slane %v84, %v91
      %v95 = vmul.f32 %v88, %v45
      %v96 = vmul.f32 %v92, %v46
      %vm97 = vcmask 518144
      %v98 = vsel %vm97, %v95, 0.0
      %99 = vadd.xlane.f32.xlu0 %v98
      %v100 = vpop.xlane.xlu0 %99
      %v101 = vsel %vm97, %v96, 0.0
      %102 = vadd.xlane.f32.xlu0 %v101
      %v103 = vpop.xlane.xlu0 %102
      %v104 = vlaneseq
      %v105 = vshrl.u32 %v104, 7
      %v106 = vsub.s32 0, %v105
      %v107 = vrot.slane %v100, %v106
      %v108 = vlaneseq
      %v109 = vshrl.u32 %v108, 7
      %v110 = vsub.s32 0, %v109
      %v111 = vrot.slane %v103, %v110
      %v112 = vsub.f32 %v45, %v107
      %v113 = vsub.f32 %v46, %v111
      %v114 = vlaneseq
      %v115 = vshrl.u32 %v114, 7
      %v116 = vsub.s32 1, %v115
      %v117 = vrot.slane %v100, %v116
      %v118 = vlaneseq
      %v119 = vshrl.u32 %v118, 7
      %v120 = vsub.s32 1, %v119
      %v121 = vrot.slane %v103, %v120
      %v122 = vsub.f32 %v45, %v117
      %v123 = vsub.f32 %v46, %v121
      %v124 = vlaneseq
      %v125 = vshrl.u32 %v124, 7
      %v126 = vsub.s32 2, %v125
      %v127 = vrot.slane %v100, %v126
      %v128 = vlaneseq
      %v129 = vshrl.u32 %v128, 7
      %v130 = vsub.s32 2, %v129
      %v131 = vrot.slane %v103, %v130
      %v132 = vsub.f32 %v45, %v127
      %v133 = vsub.f32 %v46, %v131
      %v134 = vmul.f32 %v112, %v112
      %v135 = vmul.f32 %v113, %v113
      %v136 = vmul.f32 %v122, %v122
      %v137 = vmul.f32 %v123, %v123
      %v140 = vrot.slane %v136, 1
      %v141 = vrot.slane %v137, 1
      %v144 = vadd.f32 %v134, %v140
      %v145 = vadd.f32 %v135, %v141
      %v146 = vmul.f32 %v132, %v132
      %v147 = vmul.f32 %v133, %v133
      %v150 = vrot.slane %v146, 2
      %v151 = vrot.slane %v147, 2
      %v154 = vadd.f32 %v144, %v150
      %v155 = vadd.f32 %v145, %v151
      %v156 = vmin.f32 %v58, %v154
      %v157 = vmin.f32 %v59, %v155
      %v160 = vrot.slane %v157, 7
      %vm161 = vcmask 1041409
      %v162 = vsel %vm161, %v160, %v156
      %vm164 = vcmask 517120
      %v165 = vsel %vm164, %v162, -inf
      %166 = vmax.xlane.f32.xlu0 %v165
      %v167 = vpop.xlane.xlu0 %166
      %v169 = vrot.slane %v167, 1
      %vm172 = vcmp.eq.f32.partialorder %v156, %v167
      %vm173 = vcmp.eq.f32.partialorder %v157, %v169
      %v174 = vsel %vm172, %v48, 64
      %v175 = vsel %vm173, %v48, 64
      %v176 = vrot.slane %v175, 7
      %v177 = vsel %vm161, %v176, %v174
      %v178 = vsel %vm164, %v177, 2147483647
      %v179 = vand.u32 %v178, 65535
      %v180 = vshra.s32 %v178, 16
      %v181 = vcvt.s32.f32 %v179
      %v182 = vcvt.s32.f32 %v180
      %183 = vmin.xlane.f32.xlu0 %v182
      %v184 = vpop.xlane.xlu0 %183
      %vm185 = vcmp.eq.f32.partialorder %v182, %v184
      %v186 = vsel %vm185, %v181, inf
      %187 = vmin.xlane.f32.xlu0 %v186
      %v188 = vpop.xlane.xlu0 %187
      %v189 = vcvt.f32.s32 %v188
      %v190 = vcvt.f32.s32 %v184
      %v191 = vshll.u32 %v190, 16
      %v192 = vadd.s32 %v191, %v189
      %vm193 = vcmp.eq.s32.totalorder %v48, %v192
      %v194 = vsel %vm193, 1, 0
      %v195 = vcvt.s32.f32 %v194
      %v196 = vstv %s53
      %vm197 = vcmp.eq.s32.totalorder %v48, %v196
      %v198 = vsel %vm197, %v192, %v61
    $region18: #{tpu_custom_call.1} parent=1 // loop_footer
      %s57 = sadd.s32 1, %s53
    $region19: #{tpu_custom_call.1} parent=1 // loop_footer_branch
      %52 = sbr.rel target = $region15
    $region20: #{tpu_custom_call.1} parent=1 // loop_exit
      _
    %v199 = vlaneseq
    %v200 = vshrl.u32 %v199, 7
    %v201 = vsub.s32 0, %v200
    %v202 = vrot.slane %v61, %v201
    %204 = vbcast.lane.b32.xlu0 %v202, 256
    %v205 = vpop.permute.xlu0 %204
    %s207 = sor.u32 256, 8
    %208 = vbcast.lane.b32.xlu0 %v202, %s207
    %v209 = vpop.permute.xlu0 %208
    %v210 = vlaneseq
    %v211 = vshrl.u32 %v210, 7
    %v212 = vsub.s32 1, %v211
    %v213 = vrot.slane %v61, %v212
    %215 = vbcast.lane.b32.xlu0 %v213, 256
    %v216 = vpop.permute.xlu0 %215
    %s218 = sor.u32 256, 8
    %219 = vbcast.lane.b32.xlu0 %v213, %s218
    %v220 = vpop.permute.xlu0 %219
    %vm221 = vcmp.eq.s32.totalorder %v48, %v205
    %vm222 = vcmp.eq.s32.totalorder %v48, %v209
    %vm223 = vcmp.eq.s32.totalorder %v48, %v216
    %vm224 = vcmp.eq.s32.totalorder %v48, %v220
    %v225 = vsel %vm221, 1, 0
    %v226 = vsel %vm222, 1, 0
    %v227 = vsel %vm223, 1, 0
    %v228 = vsel %vm224, 1, 0
    %v229 = vcvt.s32.f32 %v225
    %v230 = vcvt.s32.f32 %v226
    %v231 = vcvt.s32.f32 %v227
    %v232 = vcvt.s32.f32 %v228
    %vm233 = vcmask 523264
    %234 = vst.msk [vmem:[#allocation2] sm:$0xff] %vm233, %v229
    %235 = vst.msk [vmem:[#allocation2 + $0x8] sm:$0xff] %vm233, %v230
    %236 = vst.msk [vmem:[#allocation2 + $0x50] sm:$0xff] %vm233, %v231
    %237 = vst.msk [vmem:[#allocation2 + $0x58] sm:$0xff] %vm233, %v232
    %v238 = vlaneseq
    %v239 = vshrl.u32 %v238, 7
    %v240 = vsub.s32 0, %v239
    %v241 = vrot.slane %v45, %v240
    %v242 = vlaneseq
    %v243 = vshrl.u32 %v242, 7
    %v244 = vsub.s32 0, %v243
    %v245 = vrot.slane %v46, %v244
    %v246 = vmul.f32 %v229, %v241
    %v247 = vmul.f32 %v230, %v241
    %v248 = vmul.f32 %v231, %v245
    %v249 = vmul.f32 %v232, %v245
    %v250 = vsel %vm233, %v246, 0.0
    %251 = vadd.xlane.f32.xlu0 %v250
    %v252 = vpop.xlane.xlu0 %251
    %v253 = vsel %vm233, %v247, 0.0
    %254 = vadd.xlane.f32.xlu0 %v253
    %v255 = vpop.xlane.xlu0 %254
    %v256 = vsel %vm233, %v248, 0.0
    %257 = vadd.xlane.f32.xlu0 %v256
    %v258 = vpop.xlane.xlu0 %257
    %v259 = vsel %vm233, %v249, 0.0
    %260 = vadd.xlane.f32.xlu0 %v259
    %v261 = vpop.xlane.xlu0 %260
    %v262 = vlaneseq
    %v263 = vshrl.u32 %v262, 7
    %v264 = vsub.s32 1, %v263
    %v265 = vrot.slane %v45, %v264
    %v266 = vlaneseq
    %v267 = vshrl.u32 %v266, 7
    %v268 = vsub.s32 1, %v267
    %v269 = vrot.slane %v46, %v268
    %v270 = vmul.f32 %v229, %v265
    %v271 = vmul.f32 %v230, %v265
    %v272 = vmul.f32 %v231, %v269
    %v273 = vmul.f32 %v232, %v269
    %v274 = vsel %vm233, %v270, 0.0
    %275 = vadd.xlane.f32.xlu0 %v274
    %v276 = vpop.xlane.xlu0 %275
    %v277 = vsel %vm233, %v271, 0.0
    %278 = vadd.xlane.f32.xlu0 %v277
    %v279 = vpop.xlane.xlu0 %278
    %v280 = vsel %vm233, %v272, 0.0
    %281 = vadd.xlane.f32.xlu0 %v280
    %v282 = vpop.xlane.xlu0 %281
    %v283 = vsel %vm233, %v273, 0.0
    %284 = vadd.xlane.f32.xlu0 %v283
    %v285 = vpop.xlane.xlu0 %284
    %v286 = vlaneseq
    %v287 = vshrl.u32 %v286, 7
    %v288 = vsub.s32 2, %v287
    %v289 = vrot.slane %v45, %v288
    %v290 = vlaneseq
    %v291 = vshrl.u32 %v290, 7
    %v292 = vsub.s32 2, %v291
    %v293 = vrot.slane %v46, %v292
    %v294 = vmul.f32 %v229, %v289
    %v295 = vmul.f32 %v230, %v289
    %v296 = vmul.f32 %v231, %v293
    %v297 = vmul.f32 %v232, %v293
    %v298 = vsel %vm233, %v294, 0.0
    %299 = vadd.xlane.f32.xlu0 %v298
    %v300 = vpop.xlane.xlu0 %299
    %v301 = vsel %vm233, %v295, 0.0
    %302 = vadd.xlane.f32.xlu0 %v301
    %v303 = vpop.xlane.xlu0 %302
    %v304 = vsel %vm233, %v296, 0.0
    %305 = vadd.xlane.f32.xlu0 %v304
    %v306 = vpop.xlane.xlu0 %305
    %v307 = vsel %vm233, %v297, 0.0
    %308 = vadd.xlane.f32.xlu0 %v307
    %v309 = vpop.xlane.xlu0 %308
    %v310 = vsub.f32 %v252, %v241
    %v311 = vsub.f32 %v255, %v241
    %v312 = vsub.f32 %v258, %v245
    %v313 = vsub.f32 %v261, %v245
    %v314 = vsub.f32 %v276, %v265
    %v315 = vsub.f32 %v279, %v265
    %v316 = vsub.f32 %v282, %v269
    %v317 = vsub.f32 %v285, %v269
    %v318 = vsub.f32 %v300, %v289
    %v319 = vsub.f32 %v303, %v289
    %v320 = vsub.f32 %v306, %v293
    %v321 = vsub.f32 %v309, %v293
    %v322 = vmul.f32 %v310, %v310
    %v323 = vmul.f32 %v311, %v311
    %v324 = vmul.f32 %v312, %v312
    %v325 = vmul.f32 %v313, %v313
    %v326 = vmul.f32 %v314, %v314
    %v327 = vmul.f32 %v315, %v315
    %v328 = vmul.f32 %v316, %v316
    %v329 = vmul.f32 %v317, %v317
    %v330 = vadd.f32 %v322, %v326
    %v331 = vadd.f32 %v323, %v327
    %v332 = vadd.f32 %v324, %v328
    %v333 = vadd.f32 %v325, %v329
    %v334 = vmul.f32 %v318, %v318
    %v335 = vmul.f32 %v319, %v319
    %v336 = vmul.f32 %v320, %v320
    %v337 = vmul.f32 %v321, %v321
    %v338 = vadd.f32 %v330, %v334
    %v339 = vadd.f32 %v331, %v335
    %v340 = vadd.f32 %v332, %v336
    %v341 = vadd.f32 %v333, %v337
    %v342 = vsel %vm233, %v338, inf
    %343 = vmin.xlane.f32.xlu0 %v342
    %v344 = vpop.xlane.xlu0 %343
    %v345 = vsel %vm233, %v339, inf
    %346 = vmin.xlane.f32.xlu0 %v345
    %v347 = vpop.xlane.xlu0 %346
    %v348 = vsel %vm233, %v340, inf
    %349 = vmin.xlane.f32.xlu0 %v348
    %v350 = vpop.xlane.xlu0 %349
    %v351 = vsel %vm233, %v341, inf
    %352 = vmin.xlane.f32.xlu0 %v351
    %v353 = vpop.xlane.xlu0 %352
    %vm354 = vcmp.eq.f32.partialorder %v338, %v344
    %vm355 = vcmp.eq.f32.partialorder %v339, %v347
    %vm356 = vcmp.eq.f32.partialorder %v340, %v350
    %vm357 = vcmp.eq.f32.partialorder %v341, %v353
    %v358 = vsel %vm354, %v48, 64
    %v359 = vsel %vm355, %v48, 64
    %v360 = vsel %vm356, %v48, 64
    %v361 = vsel %vm357, %v48, 64
    %v362 = vsel %vm233, %v358, 2147483647
    %v363 = vand.u32 %v362, 65535
    %v364 = vshra.s32 %v362, 16
    %v365 = vcvt.s32.f32 %v363
    %v366 = vcvt.s32.f32 %v364
    %367 = vmin.xlane.f32.xlu0 %v366
    %v368 = vpop.xlane.xlu0 %367
    %vm369 = vcmp.eq.f32.partialorder %v366, %v368
    %v370 = vsel %vm369, %v365, inf
    %371 = vmin.xlane.f32.xlu0 %v370
    %v372 = vpop.xlane.xlu0 %371
    %v373 = vcvt.f32.s32 %v372
    %v374 = vcvt.f32.s32 %v368
    %v375 = vshll.u32 %v374, 16
    %v376 = vadd.s32 %v375, %v373
    %v377 = vsel %vm233, %v359, 2147483647
    %v378 = vand.u32 %v377, 65535
    %v379 = vshra.s32 %v377, 16
    %v380 = vcvt.s32.f32 %v378
    %v381 = vcvt.s32.f32 %v379
    %382 = vmin.xlane.f32.xlu0 %v381
    %v383 = vpop.xlane.xlu0 %382
    %vm384 = vcmp.eq.f32.partialorder %v381, %v383
    %v385 = vsel %vm384, %v380, inf
    %386 = vmin.xlane.f32.xlu0 %v385
    %v387 = vpop.xlane.xlu0 %386
    %v388 = vcvt.f32.s32 %v387
    %v389 = vcvt.f32.s32 %v383
    %v390 = vshll.u32 %v389, 16
    %v391 = vadd.s32 %v390, %v388
    %v392 = vsel %vm233, %v360, 2147483647
    %v393 = vand.u32 %v392, 65535
    %v394 = vshra.s32 %v392, 16
    %v395 = vcvt.s32.f32 %v393
    %v396 = vcvt.s32.f32 %v394
    %397 = vmin.xlane.f32.xlu0 %v396
    %v398 = vpop.xlane.xlu0 %397
    %vm399 = vcmp.eq.f32.partialorder %v396, %v398
    %v400 = vsel %vm399, %v395, inf
    %401 = vmin.xlane.f32.xlu0 %v400
    %v402 = vpop.xlane.xlu0 %401
    %v403 = vcvt.f32.s32 %v402
    %v404 = vcvt.f32.s32 %v398
    %v405 = vshll.u32 %v404, 16
    %v406 = vadd.s32 %v405, %v403
    %v407 = vsel %vm233, %v361, 2147483647
    %v408 = vand.u32 %v407, 65535
    %v409 = vshra.s32 %v407, 16
    %v410 = vcvt.s32.f32 %v408
    %v411 = vcvt.s32.f32 %v409
    %412 = vmin.xlane.f32.xlu0 %v411
    %v413 = vpop.xlane.xlu0 %412
    %vm414 = vcmp.eq.f32.partialorder %v411, %v413
    %v415 = vsel %vm414, %v410, inf
    %416 = vmin.xlane.f32.xlu0 %v415
    %v417 = vpop.xlane.xlu0 %416
    %v418 = vcvt.f32.s32 %v417
    %v419 = vcvt.f32.s32 %v413
    %v420 = vshll.u32 %v419, 16
    %v421 = vadd.s32 %v420, %v418
    %vm422 = vcmp.eq.s32.totalorder %v48, %v376
    %vm423 = vcmp.eq.s32.totalorder %v48, %v391
    %vm424 = vcmp.eq.s32.totalorder %v48, %v406
    %vm425 = vcmp.eq.s32.totalorder %v48, %v421
    %v426 = vsel %vm422, 1, 0
    %v427 = vsel %vm423, 1, 0
    %v428 = vsel %vm424, 1, 0
    %v429 = vsel %vm425, 1, 0
    %v430 = vcvt.s32.f32 %v426
    %v431 = vcvt.s32.f32 %v427
    %v432 = vcvt.s32.f32 %v428
    %v433 = vcvt.s32.f32 %v429
    %434 = vst.msk [vmem:[#allocation2 + $0x10] sm:$0xff] %vm233, %v430
    %435 = vst.msk [vmem:[#allocation2 + $0x18] sm:$0xff] %vm233, %v431
    %436 = vst.msk [vmem:[#allocation2 + $0x60] sm:$0xff] %vm233, %v432
    %437 = vst.msk [vmem:[#allocation2 + $0x68] sm:$0xff] %vm233, %v433
    %v438 = vsel %vm422, 1e+30, %v338
    %v439 = vsel %vm423, 1e+30, %v339
    %v440 = vsel %vm424, 1e+30, %v340
    %v441 = vsel %vm425, 1e+30, %v341
    %v442 = vsel %vm233, %v438, inf
    %443 = vmin.xlane.f32.xlu0 %v442
    %v444 = vpop.xlane.xlu0 %443
    %v445 = vsel %vm233, %v439, inf
    %446 = vmin.xlane.f32.xlu0 %v445
    %v447 = vpop.xlane.xlu0 %446
    %v448 = vsel %vm233, %v440, inf
    %449 = vmin.xlane.f32.xlu0 %v448
    %v450 = vpop.xlane.xlu0 %449
    %v451 = vsel %vm233, %v441, inf
    %452 = vmin.xlane.f32.xlu0 %v451
    %v453 = vpop.xlane.xlu0 %452
    %vm454 = vcmp.eq.f32.partialorder %v438, %v444
    %vm455 = vcmp.eq.f32.partialorder %v439, %v447
    %vm456 = vcmp.eq.f32.partialorder %v440, %v450
    %vm457 = vcmp.eq.f32.partialorder %v441, %v453
    %v458 = vsel %vm454, %v48, 64
    %v459 = vsel %vm455, %v48, 64
    %v460 = vsel %vm456, %v48, 64
    %v461 = vsel %vm457, %v48, 64
    %v462 = vsel %vm233, %v458, 2147483647
    %v463 = vand.u32 %v462, 65535
    %v464 = vshra.s32 %v462, 16
    %v465 = vcvt.s32.f32 %v463
    %v466 = vcvt.s32.f32 %v464
    %467 = vmin.xlane.f32.xlu0 %v466
    %v468 = vpop.xlane.xlu0 %467
    %vm469 = vcmp.eq.f32.partialorder %v466, %v468
    %v470 = vsel %vm469, %v465, inf
    %471 = vmin.xlane.f32.xlu0 %v470
    %v472 = vpop.xlane.xlu0 %471
    %v473 = vcvt.f32.s32 %v472
    %v474 = vcvt.f32.s32 %v468
    %v475 = vshll.u32 %v474, 16
    %v476 = vadd.s32 %v475, %v473
    %v477 = vsel %vm233, %v459, 2147483647
    %v478 = vand.u32 %v477, 65535
    %v479 = vshra.s32 %v477, 16
    %v480 = vcvt.s32.f32 %v478
    %v481 = vcvt.s32.f32 %v479
    %482 = vmin.xlane.f32.xlu0 %v481
    %v483 = vpop.xlane.xlu0 %482
    %vm484 = vcmp.eq.f32.partialorder %v481, %v483
    %v485 = vsel %vm484, %v480, inf
    %486 = vmin.xlane.f32.xlu0 %v485
    %v487 = vpop.xlane.xlu0 %486
    %v488 = vcvt.f32.s32 %v487
    %v489 = vcvt.f32.s32 %v483
    %v490 = vshll.u32 %v489, 16
    %v491 = vadd.s32 %v490, %v488
    %v492 = vsel %vm233, %v460, 2147483647
    %v493 = vand.u32 %v492, 65535
    %v494 = vshra.s32 %v492, 16
    %v495 = vcvt.s32.f32 %v493
    %v496 = vcvt.s32.f32 %v494
    %497 = vmin.xlane.f32.xlu0 %v496
    %v498 = vpop.xlane.xlu0 %497
    %vm499 = vcmp.eq.f32.partialorder %v496, %v498
    %v500 = vsel %vm499, %v495, inf
    %501 = vmin.xlane.f32.xlu0 %v500
    %v502 = vpop.xlane.xlu0 %501
    %v503 = vcvt.f32.s32 %v502
    %v504 = vcvt.f32.s32 %v498
    %v505 = vshll.u32 %v504, 16
    %v506 = vadd.s32 %v505, %v503
    %v507 = vsel %vm233, %v461, 2147483647
    %v508 = vand.u32 %v507, 65535
    %v509 = vshra.s32 %v507, 16
    %v510 = vcvt.s32.f32 %v508
    %v511 = vcvt.s32.f32 %v509
    %512 = vmin.xlane.f32.xlu0 %v511
    %v513 = vpop.xlane.xlu0 %512
    %vm514 = vcmp.eq.f32.partialorder %v511, %v513
    %v515 = vsel %vm514, %v510, inf
    %516 = vmin.xlane.f32.xlu0 %v515
    %v517 = vpop.xlane.xlu0 %516
    %v518 = vcvt.f32.s32 %v517
    %v519 = vcvt.f32.s32 %v513
    %v520 = vshll.u32 %v519, 16
    %v521 = vadd.s32 %v520, %v518
    %vm522 = vcmp.eq.s32.totalorder %v48, %v476
    %vm523 = vcmp.eq.s32.totalorder %v48, %v491
    %vm524 = vcmp.eq.s32.totalorder %v48, %v506
    %vm525 = vcmp.eq.s32.totalorder %v48, %v521
    %v526 = vsel %vm522, 1, 0
    %v527 = vsel %vm523, 1, 0
    %v528 = vsel %vm524, 1, 0
    %v529 = vsel %vm525, 1, 0
    %v530 = vcvt.s32.f32 %v526
    %v531 = vcvt.s32.f32 %v527
    %v532 = vcvt.s32.f32 %v528
    %v533 = vcvt.s32.f32 %v529
    %534 = vst.msk [vmem:[#allocation2 + $0x20] sm:$0xff] %vm233, %v530
    %535 = vst.msk [vmem:[#allocation2 + $0x28] sm:$0xff] %vm233, %v531
    %536 = vst.msk [vmem:[#allocation2 + $0x70] sm:$0xff] %vm233, %v532
    %537 = vst.msk [vmem:[#allocation2 + $0x78] sm:$0xff] %vm233, %v533
    %v538 = vsel %vm522, 1e+30, %v438
    %v539 = vsel %vm523, 1e+30, %v439
    %v540 = vsel %vm524, 1e+30, %v440
    %v541 = vsel %vm525, 1e+30, %v441
    %v542 = vsel %vm233, %v538, inf
    %543 = vmin.xlane.f32.xlu0 %v542
    %v544 = vpop.xlane.xlu0 %543
    %v545 = vsel %vm233, %v539, inf
    %546 = vmin.xlane.f32.xlu0 %v545
    %v547 = vpop.xlane.xlu0 %546
    %v548 = vsel %vm233, %v540, inf
    %549 = vmin.xlane.f32.xlu0 %v548
    %v550 = vpop.xlane.xlu0 %549
    %v551 = vsel %vm233, %v541, inf
    %552 = vmin.xlane.f32.xlu0 %v551
    %v553 = vpop.xlane.xlu0 %552
    %vm554 = vcmp.eq.f32.partialorder %v538, %v544
    %vm555 = vcmp.eq.f32.partialorder %v539, %v547
    %vm556 = vcmp.eq.f32.partialorder %v540, %v550
    %vm557 = vcmp.eq.f32.partialorder %v541, %v553
    %v558 = vsel %vm554, %v48, 64
    %v559 = vsel %vm555, %v48, 64
    %v560 = vsel %vm556, %v48, 64
    %v561 = vsel %vm557, %v48, 64
    %v562 = vsel %vm233, %v558, 2147483647
    %v563 = vand.u32 %v562, 65535
    %v564 = vshra.s32 %v562, 16
    %v565 = vcvt.s32.f32 %v563
    %v566 = vcvt.s32.f32 %v564
    %567 = vmin.xlane.f32.xlu0 %v566
    %v568 = vpop.xlane.xlu0 %567
    %vm569 = vcmp.eq.f32.partialorder %v566, %v568
    %v570 = vsel %vm569, %v565, inf
    %571 = vmin.xlane.f32.xlu0 %v570
    %v572 = vpop.xlane.xlu0 %571
    %v573 = vcvt.f32.s32 %v572
    %v574 = vcvt.f32.s32 %v568
    %v575 = vshll.u32 %v574, 16
    %v576 = vadd.s32 %v575, %v573
    %v577 = vsel %vm233, %v559, 2147483647
    %v578 = vand.u32 %v577, 65535
    %v579 = vshra.s32 %v577, 16
    %v580 = vcvt.s32.f32 %v578
    %v581 = vcvt.s32.f32 %v579
    %582 = vmin.xlane.f32.xlu0 %v581
    %v583 = vpop.xlane.xlu0 %582
    %vm584 = vcmp.eq.f32.partialorder %v581, %v583
    %v585 = vsel %vm584, %v580, inf
    %586 = vmin.xlane.f32.xlu0 %v585
    %v587 = vpop.xlane.xlu0 %586
    %v588 = vcvt.f32.s32 %v587
    %v589 = vcvt.f32.s32 %v583
    %v590 = vshll.u32 %v589, 16
    %v591 = vadd.s32 %v590, %v588
    %v592 = vsel %vm233, %v560, 2147483647
    %v593 = vand.u32 %v592, 65535
    %v594 = vshra.s32 %v592, 16
    %v595 = vcvt.s32.f32 %v593
    %v596 = vcvt.s32.f32 %v594
    %597 = vmin.xlane.f32.xlu0 %v596
    %v598 = vpop.xlane.xlu0 %597
    %vm599 = vcmp.eq.f32.partialorder %v596, %v598
    %v600 = vsel %vm599, %v595, inf
    %601 = vmin.xlane.f32.xlu0 %v600
    %v602 = vpop.xlane.xlu0 %601
    %v603 = vcvt.f32.s32 %v602
    %v604 = vcvt.f32.s32 %v598
    %v605 = vshll.u32 %v604, 16
    %v606 = vadd.s32 %v605, %v603
    %v607 = vsel %vm233, %v561, 2147483647
    %v608 = vand.u32 %v607, 65535
    %v609 = vshra.s32 %v607, 16
    %v610 = vcvt.s32.f32 %v608
    %v611 = vcvt.s32.f32 %v609
    %612 = vmin.xlane.f32.xlu0 %v611
    %v613 = vpop.xlane.xlu0 %612
    %vm614 = vcmp.eq.f32.partialorder %v611, %v613
    %v615 = vsel %vm614, %v610, inf
    %616 = vmin.xlane.f32.xlu0 %v615
    %v617 = vpop.xlane.xlu0 %616
    %v618 = vcvt.f32.s32 %v617
    %v619 = vcvt.f32.s32 %v613
    %v620 = vshll.u32 %v619, 16
    %v621 = vadd.s32 %v620, %v618
    %vm622 = vcmp.eq.s32.totalorder %v48, %v576
    %vm623 = vcmp.eq.s32.totalorder %v48, %v591
    %vm624 = vcmp.eq.s32.totalorder %v48, %v606
    %vm625 = vcmp.eq.s32.totalorder %v48, %v621
    %v626 = vsel %vm622, 1, 0
    %v627 = vsel %vm623, 1, 0
    %v628 = vsel %vm624, 1, 0
    %v629 = vsel %vm625, 1, 0
    %v630 = vcvt.s32.f32 %v626
    %v631 = vcvt.s32.f32 %v627
    %v632 = vcvt.s32.f32 %v628
    %v633 = vcvt.s32.f32 %v629
    %634 = vst.msk [vmem:[#allocation2 + $0x30] sm:$0xff] %vm233, %v630
    %635 = vst.msk [vmem:[#allocation2 + $0x38] sm:$0xff] %vm233, %v631
    %636 = vst.msk [vmem:[#allocation2 + $0x80] sm:$0xff] %vm233, %v632
    %637 = vst.msk [vmem:[#allocation2 + $0x88] sm:$0xff] %vm233, %v633
    %v638 = vsel %vm622, 1e+30, %v538
    %v639 = vsel %vm623, 1e+30, %v539
    %v640 = vsel %vm624, 1e+30, %v540
    %v641 = vsel %vm625, 1e+30, %v541
    %v642 = vsel %vm233, %v638, inf
    %643 = vmin.xlane.f32.xlu0 %v642
    %v644 = vpop.xlane.xlu0 %643
    %v645 = vsel %vm233, %v639, inf
    %646 = vmin.xlane.f32.xlu0 %v645
    %v647 = vpop.xlane.xlu0 %646
    %v648 = vsel %vm233, %v640, inf
    %649 = vmin.xlane.f32.xlu0 %v648
    %v650 = vpop.xlane.xlu0 %649
    %v651 = vsel %vm233, %v641, inf
    %652 = vmin.xlane.f32.xlu0 %v651
    %v653 = vpop.xlane.xlu0 %652
    %vm654 = vcmp.eq.f32.partialorder %v638, %v644
    %vm655 = vcmp.eq.f32.partialorder %v639, %v647
    %vm656 = vcmp.eq.f32.partialorder %v640, %v650
    %vm657 = vcmp.eq.f32.partialorder %v641, %v653
    %v658 = vsel %vm654, %v48, 64
    %v659 = vsel %vm655, %v48, 64
    %v660 = vsel %vm656, %v48, 64
    %v661 = vsel %vm657, %v48, 64
    %v662 = vsel %vm233, %v658, 2147483647
    %v663 = vand.u32 %v662, 65535
    %v664 = vshra.s32 %v662, 16
    %v665 = vcvt.s32.f32 %v663
    %v666 = vcvt.s32.f32 %v664
    %667 = vmin.xlane.f32.xlu0 %v666
    %v668 = vpop.xlane.xlu0 %667
    %vm669 = vcmp.eq.f32.partialorder %v666, %v668
    %v670 = vsel %vm669, %v665, inf
    %671 = vmin.xlane.f32.xlu0 %v670
    %v672 = vpop.xlane.xlu0 %671
    %v673 = vcvt.f32.s32 %v672
    %v674 = vcvt.f32.s32 %v668
    %v675 = vshll.u32 %v674, 16
    %v676 = vadd.s32 %v675, %v673
    %v677 = vsel %vm233, %v659, 2147483647
    %v678 = vand.u32 %v677, 65535
    %v679 = vshra.s32 %v677, 16
    %v680 = vcvt.s32.f32 %v678
    %v681 = vcvt.s32.f32 %v679
    %682 = vmin.xlane.f32.xlu0 %v681
    %v683 = vpop.xlane.xlu0 %682
    %vm684 = vcmp.eq.f32.partialorder %v681, %v683
    %v685 = vsel %vm684, %v680, inf
    %686 = vmin.xlane.f32.xlu0 %v685
    %v687 = vpop.xlane.xlu0 %686
    %v688 = vcvt.f32.s32 %v687
    %v689 = vcvt.f32.s32 %v683
    %v690 = vshll.u32 %v689, 16
    %v691 = vadd.s32 %v690, %v688
    %v692 = vsel %vm233, %v660, 2147483647
    %v693 = vand.u32 %v692, 65535
    %v694 = vshra.s32 %v692, 16
    %v695 = vcvt.s32.f32 %v693
    %v696 = vcvt.s32.f32 %v694
    %697 = vmin.xlane.f32.xlu0 %v696
    %v698 = vpop.xlane.xlu0 %697
    %vm699 = vcmp.eq.f32.partialorder %v696, %v698
    %v700 = vsel %vm699, %v695, inf
    %701 = vmin.xlane.f32.xlu0 %v700
    %v702 = vpop.xlane.xlu0 %701
    %v703 = vcvt.f32.s32 %v702
    %v704 = vcvt.f32.s32 %v698
    %v705 = vshll.u32 %v704, 16
    %v706 = vadd.s32 %v705, %v703
    %v707 = vsel %vm233, %v661, 2147483647
    %v708 = vand.u32 %v707, 65535
    %v709 = vshra.s32 %v707, 16
    %v710 = vcvt.s32.f32 %v708
    %v711 = vcvt.s32.f32 %v709
    %712 = vmin.xlane.f32.xlu0 %v711
    %v713 = vpop.xlane.xlu0 %712
    %vm714 = vcmp.eq.f32.partialorder %v711, %v713
    %v715 = vsel %vm714, %v710, inf
    %716 = vmin.xlane.f32.xlu0 %v715
    %v717 = vpop.xlane.xlu0 %716
    %v718 = vcvt.f32.s32 %v717
    %v719 = vcvt.f32.s32 %v713
    %v720 = vshll.u32 %v719, 16
    %v721 = vadd.s32 %v720, %v718
    %vm722 = vcmp.eq.s32.totalorder %v48, %v676
    %vm723 = vcmp.eq.s32.totalorder %v48, %v691
    %vm724 = vcmp.eq.s32.totalorder %v48, %v706
    %vm725 = vcmp.eq.s32.totalorder %v48, %v721
    %v726 = vsel %vm722, 1, 0
    %v727 = vsel %vm723, 1, 0
    %v728 = vsel %vm724, 1, 0
    %v729 = vsel %vm725, 1, 0
    %v730 = vcvt.s32.f32 %v726
    %v731 = vcvt.s32.f32 %v727
    %v732 = vcvt.s32.f32 %v728
    %v733 = vcvt.s32.f32 %v729
    %734 = vst.msk [vmem:[#allocation2 + $0x40] sm:$0xff] %vm233, %v730
    %735 = vst.msk [vmem:[#allocation2 + $0x48] sm:$0xff] %vm233, %v731
    %736 = vst.msk [vmem:[#allocation2 + $0x90] sm:$0xff] %vm233, %v732
    %737 = vst.msk [vmem:[#allocation2 + $0x98] sm:$0xff] %vm233, %v733
    %v738 = vld [vmem:[#allocation2] sm:$0xff]
    %v739 = vld [vmem:[#allocation2 + $0x8] sm:$0xff]
    %v740 = vld [vmem:[#allocation2 + $0x10] sm:$0xff]
    %v741 = vld [vmem:[#allocation2 + $0x18] sm:$0xff]
    %v742 = vld [vmem:[#allocation2 + $0x20] sm:$0xff]
    %v743 = vld [vmem:[#allocation2 + $0x28] sm:$0xff]
    %v744 = vld [vmem:[#allocation2 + $0x30] sm:$0xff]
    %v745 = vld [vmem:[#allocation2 + $0x38] sm:$0xff]
    %v746 = vld [vmem:[#allocation2 + $0x40] sm:$0xff]
    %v747 = vld [vmem:[#allocation2 + $0x48] sm:$0xff]
    %v748 = vld [vmem:[#allocation2 + $0x50] sm:$0xff]
    %v749 = vld [vmem:[#allocation2 + $0x58] sm:$0xff]
    %v750 = vld [vmem:[#allocation2 + $0x60] sm:$0xff]
    %v751 = vld [vmem:[#allocation2 + $0x68] sm:$0xff]
    %v752 = vld [vmem:[#allocation2 + $0x70] sm:$0xff]
    %v753 = vld [vmem:[#allocation2 + $0x78] sm:$0xff]
    %v754 = vld [vmem:[#allocation2 + $0x80] sm:$0xff]
    %v755 = vld [vmem:[#allocation2 + $0x88] sm:$0xff]
    %v756 = vld [vmem:[#allocation2 + $0x90] sm:$0xff]
    %v757 = vld [vmem:[#allocation2 + $0x98] sm:$0xff]
    %v759 = vsel %vm233, %v738, 0
    %v762 = vsel %vm233, %v739, 0
    %v765 = vsel %vm233, %v740, 0
    %v768 = vsel %vm233, %v741, 0
    %v771 = vsel %vm233, %v742, 0
    %v774 = vsel %vm233, %v743, 0
    %v777 = vsel %vm233, %v744, 0
    %v780 = vsel %vm233, %v745, 0
    %v783 = vsel %vm233, %v746, 0
    %v786 = vsel %vm233, %v747, 0
    %788 = vmatprep.subr.mxu0 0.0
    %v789 = vand.u32 %v29, 4294901760
    %790 = vmatpush1.msra.mxu0 %v789
    %791 = vmatprep.subr.mxu0 0.0
    %v792 = vand.u32 %v30, 4294901760
    %793 = vmatpush1.msra.mxu0 %v792
    %794 = vmatprep.subr.mxu0 0.0
    %v795 = vand.u32 %v31, 4294901760
    %796 = vmatpush1.msra.mxu0 %v795
    %797 = vmatprep.subr.mxu0 0.0
    %v798 = vand.u32 %v32, 4294901760
    %799 = vmatpush1.msra.mxu0 %v798
    %800 = vmatprep.subr.mxu0 0.0
    %v801 = vand.u32 %v33, 4294901760
    %802 = vmatpush1.msra.mxu0 %v801
    %803 = vmatprep.subr.mxu0 0.0
    %v804 = vand.u32 %v34, 4294901760
    %805 = vmatpush1.msra.mxu0 %v804
    %806 = vmatprep.subr.mxu0 0.0
    %v807 = vand.u32 %v35, 4294901760
    %808 = vmatpush1.msra.mxu0 %v807
    %809 = vmatprep.subr.mxu0 0.0
    %v810 = vand.u32 %v36, 4294901760
    %811 = vmatpush1.msra.mxu0 %v810
    %812 = vmatprep.subr.mxu0 0.0
    %813 = vmatpush1.msra.mxu0 0.0
    %814 = vmatprep.subr.mxu0 0.0
    %815 = vmatpush1.msra.mxu0 0.0
    %816 = vmatprep.subr.mxu0 0.0
    %817 = vmatpush1.msra.mxu0 0.0
    %818 = vmatprep.subr.mxu0 0.0
    %819 = vmatpush1.msra.mxu0 0.0
    %820 = vmatprep.subr.mxu0 0.0
    %821 = vmatpush1.msra.mxu0 0.0
    %822 = vmatprep.subr.mxu0 0.0
    %823 = vmatpush1.msra.mxu0 0.0
    %824 = vmatprep.subr.mxu0 0.0
    %825 = vmatpush1.msra.mxu0 0.0
    %826 = vmatprep.subr.mxu0 0.0
    %827 = vmatpush1.msra.mxu0 0.0
    %828 = vmatprep.subr.mxu0 0.0
    %829 = vmatpush1.msra.mxu0 0.0
    %830 = vmatprep.subr.mxu0 0.0
    %831 = vmatpush1.msra.mxu0 0.0
    %832 = vmatprep.subr.mxu0 0.0
    %833 = vmatpush1.msra.mxu0 0.0
    %834 = vmatprep.subr.mxu0 0.0
    %835 = vmatpush1.msra.mxu0 0.0
    %836 = vmatprep.subr.mxu0 0.0
    %837 = vmatpush1.msra.mxu0 0.0
    %838 = vmatprep.subr.mxu0 0.0
    %839 = vmatpush1.msra.mxu0 0.0
    %840 = vmatprep.subr.mxu0 0.0
    %841 = vmatpush1.msra.mxu0 0.0
    %842 = vmatprep.subr.mxu0 0.0
    %843 = vmatpush1.msra.mxu0 0.0
    %844 = vmatprep.subr.mxu0 0.0
    %845 = vmatpush1.msra.mxu0 0.0
    %846 = vmatprep.subr.mxu0 0.0
    %847 = vmatpush1.msra.mxu0 0.0
    %848 = vmatprep.subr.mxu0 0.0
    %849 = vmatpush1.msra.mxu0 0.0
    %850 = vmatprep.subr.mxu0 0.0
    %851 = vmatpush1.msra.mxu0 0.0
    %852 = vmatprep.subr.mxu0 0.0
    %853 = vmatpush1.msra.mxu0 0.0
    %854 = vmatprep.subr.mxu0 0.0
    %855 = vmatpush1.msra.mxu0 0.0
    %856 = vmatprep.subr.mxu0 0.0
    %857 = vmatpush1.msra.mxu0 0.0
    %858 = vmatprep.subr.mxu0 0.0
    %859 = vmatpush1.msra.mxu0 0.0
    %860 = vmatprep.mubr.f32.mxu0 0.0
    %v861 = vand.u32 %v759, 4294901760
    %v862 = vsub.f32 %v759, %v861
    %v863 = vand.u32 %v862, 4294901760
    %v864 = vsub.f32 %v862, %v863
    %v865 = vand.u32 %v864, 4294901760
    %866 = vmatmul.mubr.f32.gmra.mrb[0].mxu0 %v865
    %v867 = vpop.f32.mrb[0].mxu0
    %v868 = vadd.f32 0.0, %v867
    %v869 = vpop.f32.mrb[0].mxu0
    %870 = vmatprep.mubr.f32.mxu0 0.0
    %v871 = vand.u32 %v762, 4294901760
    %v872 = vsub.f32 %v762, %v871
    %v873 = vand.u32 %v872, 4294901760
    %v874 = vsub.f32 %v872, %v873
    %v875 = vand.u32 %v874, 4294901760
    %876 = vmatmul.mubr.f32.gmra.mrb[0].mxu0 %v875
    %v877 = vpop.f32.mrb[0].mxu0
    %v878 = vadd.f32 0.0, %v877
    %v879 = vpop.f32.mrb[0].mxu0
    %880 = vmatprep.mubr.f32.mxu0 0.0
    %v881 = vand.u32 %v765, 4294901760
    %v882 = vsub.f32 %v765, %v881
    %v883 = vand.u32 %v882, 4294901760
    %v884 = vsub.f32 %v882, %v883
    %v885 = vand.u32 %v884, 4294901760
    %886 = vmatmul.mubr.f32.gmra.mrb[0].mxu0 %v885
    %v887 = vpop.f32.mrb[0].mxu0
    %v888 = vadd.f32 0.0, %v887
    %v889 = vpop.f32.mrb[0].mxu0
    %890 = vmatprep.mubr.f32.mxu0 0.0
    %v891 = vand.u32 %v768, 4294901760
    %v892 = vsub.f32 %v768, %v891
    %v893 = vand.u32 %v892, 4294901760
    %v894 = vsub.f32 %v892, %v893
    %v895 = vand.u32 %v894, 4294901760
    %896 = vmatmul.mubr.f32.gmra.mrb[0].mxu0 %v895
    %v897 = vpop.f32.mrb[0].mxu0
    %v898 = vadd.f32 0.0, %v897
    %v899 = vpop.f32.mrb[0].mxu0
    %900 = vmatprep.mubr.f32.mxu0 0.0
    %v901 = vand.u32 %v771, 4294901760
    %v902 = vsub.f32 %v771, %v901
    %v903 = vand.u32 %v902, 4294901760
    %v904 = vsub.f32 %v902, %v903
    %v905 = vand.u32 %v904, 4294901760
    %906 = vmatmul.mubr.f32.gmra.mrb[0].mxu0 %v905
    %v907 = vpop.f32.mrb[0].mxu0
    %v908 = vadd.f32 0.0, %v907
    %v909 = vpop.f32.mrb[0].mxu0
    %910 = vmatprep.mubr.f32.mxu0 0.0
    %v911 = vand.u32 %v774, 4294901760
    %v912 = vsub.f32 %v774, %v911
    %v913 = vand.u32 %v912, 4294901760
    %v914 = vsub.f32 %v912, %v913
    %v915 = vand.u32 %v914, 4294901760
    %916 = vmatmul.mubr.f32.gmra.mrb[0].mxu0 %v915
    %v917 = vpop.f32.mrb[0].mxu0
    %v918 = vadd.f32 0.0, %v917
    %v919 = vpop.f32.mrb[0].mxu0
    %920 = vmatprep.mubr.f32.mxu0 0.0
    %v921 = vand.u32 %v777, 4294901760
    %v922 = vsub.f32 %v777, %v921
    %v923 = vand.u32 %v922, 4294901760
    %v924 = vsub.f32 %v922, %v923
    %v925 = vand.u32 %v924, 4294901760
    %926 = vmatmul.mubr.f32.gmra.mrb[0].mxu0 %v925
    %v927 = vpop.f32.mrb[0].mxu0
    %v928 = vadd.f32 0.0, %v927
    %v929 = vpop.f32.mrb[0].mxu0
    %930 = vmatprep.mubr.f32.mxu0 0.0
    %v931 = vand.u32 %v780, 4294901760
    %v932 = vsub.f32 %v780, %v931
    %v933 = vand.u32 %v932, 4294901760
    %v934 = vsub.f32 %v932, %v933
    %v935 = vand.u32 %v934, 4294901760
    %936 = vmatmul.mubr.f32.gmra.mrb[0].mxu0 %v935
    %v937 = vpop.f32.mrb[0].mxu0
    %v938 = vadd.f32 0.0, %v937
    %v939 = vpop.f32.mrb[0].mxu0
    %940 = vmatprep.mubr.f32.mxu0 0.0
    %v941 = vand.u32 %v783, 4294901760
    %v942 = vsub.f32 %v783, %v941
    %v943 = vand.u32 %v942, 4294901760
    %v944 = vsub.f32 %v942, %v943
    %v945 = vand.u32 %v944, 4294901760
    %946 = vmatmul.mubr.f32.gmra.mrb[0].mxu0 %v945
    %v947 = vpop.f32.mrb[0].mxu0
    %v948 = vadd.f32 0.0, %v947
    %v949 = vpop.f32.mrb[0].mxu0
    %950 = vmatprep.mubr.f32.mxu0 0.0
    %v951 = vand.u32 %v786, 4294901760
    %v952 = vsub.f32 %v786, %v951
    %v953 = vand.u32 %v952, 4294901760
    %v954 = vsub.f32 %v952, %v953
    %v955 = vand.u32 %v954, 4294901760
    %956 = vmatmul.mubr.f32.gmra.mrb[0].mxu0 %v955
    %v957 = vpop.f32.mrb[0].mxu0
    %v958 = vadd.f32 0.0, %v957
    %v959 = vpop.f32.mrb[0].mxu0
    %960 = vdwg.mxu0
    %961 = vmatprep.subr.mxu0 0.0
    %v962 = vand.u32 %v29, 4294901760
    %v963 = vsub.f32 %v29, %v962
    %v964 = vand.u32 %v963, 4294901760
    %v965 = vsub.f32 %v963, %v964
    %v966 = vand.u32 %v965, 4294901760
    %967 = vmatpush1.msra.mxu0 %v966
    %968 = vmatprep.subr.mxu0 0.0
    %v969 = vand.u32 %v30, 4294901760
    %v970 = vsub.f32 %v30, %v969
    %v971 = vand.u32 %v970, 4294901760
    %v972 = vsub.f32 %v970, %v971
    %v973 = vand.u32 %v972, 4294901760
    %974 = vmatpush1.msra.mxu0 %v973
    %975 = vmatprep.subr.mxu0 0.0
    %v976 = vand.u32 %v31, 4294901760
    %v977 = vsub.f32 %v31, %v976
    %v978 = vand.u32 %v977, 4294901760
    %v979 = vsub.f32 %v977, %v978
    %v980 = vand.u32 %v979, 4294901760
    %981 = vmatpush1.msra.mxu0 %v980
    %982 = vmatprep.subr.mxu0 0.0
    %v983 = vand.u32 %v32, 4294901760
    %v984 = vsub.f32 %v32, %v983
    %v985 = vand.u32 %v984, 4294901760
    %v986 = vsub.f32 %v984, %v985
    %v987 = vand.u32 %v986, 4294901760
    %988 = vmatpush1.msra.mxu0 %v987
    %989 = vmatprep.subr.mxu0 0.0
    %v990 = vand.u32 %v33, 4294901760
    %v991 = vsub.f32 %v33, %v990
    %v992 = vand.u32 %v991, 4294901760
    %v993 = vsub.f32 %v991, %v992
    %v994 = vand.u32 %v993, 4294901760
    %995 = vmatpush1.msra.mxu0 %v994
    %996 = vmatprep.subr.mxu0 0.0
    %v997 = vand.u32 %v34, 4294901760
    %v998 = vsub.f32 %v34, %v997
    %v999 = vand.u32 %v998, 4294901760
    %v1000 = vsub.f32 %v998, %v999
    %v1001 = vand.u32 %v1000, 4294901760
    %1002 = vmatpush1.msra.mxu0 %v1001
    %1003 = vmatprep.subr.mxu0 0.0
    %v1004 = vand.u32 %v35, 4294901760
    %v1005 = vsub.f32 %v35, %v1004
    %v1006 = vand.u32 %v1005, 4294901760
    %v1007 = vsub.f32 %v1005, %v1006
    %v1008 = vand.u32 %v1007, 4294901760
    %1009 = vmatpush1.msra.mxu0 %v1008
    %1010 = vmatprep.subr.mxu0 0.0
    %v1011 = vand.u32 %v36, 4294901760
    %v1012 = vsub.f32 %v36, %v1011
    %v1013 = vand.u32 %v1012, 4294901760
    %v1014 = vsub.f32 %v1012, %v1013
    %v1015 = vand.u32 %v1014, 4294901760
    %1016 = vmatpush1.msra.mxu0 %v1015
    %1017 = vmatprep.subr.mxu0 0.0
    %1018 = vmatpush1.msra.mxu0 0.0
    %1019 = vmatprep.subr.mxu0 0.0
    %1020 = vmatpush1.msra.mxu0 0.0
    %1021 = vmatprep.subr.mxu0 0.0
    %1022 = vmatpush1.msra.mxu0 0.0
    %1023 = vmatprep.subr.mxu0 0.0
    %1024 = vmatpush1.msra.mxu0 0.0
    %1025 = vmatprep.subr.mxu0 0.0
    %1026 = vmatpush1.msra.mxu0 0.0
    %1027 = vmatprep.subr.mxu0 0.0
    %1028 = vmatpush1.msra.mxu0 0.0
    %1029 = vmatprep.subr.mxu0 0.0
    %1030 = vmatpush1.msra.mxu0 0.0
    %1031 = vmatprep.subr.mxu0 0.0
    %1032 = vmatpush1.msra.mxu0 0.0
    %1033 = vmatprep.subr.mxu0 0.0
    %1034 = vmatpush1.msra.mxu0 0.0
    %1035 = vmatprep.subr.mxu0 0.0
    %1036 = vmatpush1.msra.mxu0 0.0
    %1037 = vmatprep.subr.mxu0 0.0
    %1038 = vmatpush1.msra.mxu0 0.0
    %1039 = vmatprep.subr.mxu0 0.0
    %1040 = vmatpush1.msra.mxu0 0.0
    %1041 = vmatprep.subr.mxu0 0.0
    %1042 = vmatpush1.msra.mxu0 0.0
    %1043 = vmatprep.subr.mxu0 0.0
    %1044 = vmatpush1.msra.mxu0 0.0
    %1045 = vmatprep.subr.mxu0 0.0
    %1046 = vmatpush1.msra.mxu0 0.0
    %1047 = vmatprep.subr.mxu0 0.0
    %1048 = vmatpush1.msra.mxu0 0.0
    %1049 = vmatprep.subr.mxu0 0.0
    %1050 = vmatpush1.msra.mxu0 0.0
    %1051 = vmatprep.subr.mxu0 0.0
    %1052 = vmatpush1.msra.mxu0 0.0
    %1053 = vmatprep.subr.mxu0 0.0
    %1054 = vmatpush1.msra.mxu0 0.0
    %1055 = vmatprep.subr.mxu0 0.0
    %1056 = vmatpush1.msra.mxu0 0.0
    %1057 = vmatprep.subr.mxu0 0.0
    %1058 = vmatpush1.msra.mxu0 0.0
    %1059 = vmatprep.subr.mxu0 0.0
    %1060 = vmatpush1.msra.mxu0 0.0
    %1061 = vmatprep.subr.mxu0 0.0
    %1062 = vmatpush1.msra.mxu0 0.0
    %1063 = vmatprep.subr.mxu0 0.0
    %1064 = vmatpush1.msra.mxu0 0.0
    %1065 = vmatprep.mubr.f32.mxu0 0.0
    %v1066 = vand.u32 %v759, 4294901760
    %1067 = vmatmul.mubr.f32.gmra.mrb[0].mxu0 %v1066
    %v1068 = vpop.f32.mrb[0].mxu0
    %v1069 = vadd.f32 %v868, %v1068
    %v1070 = vpop.f32.mrb[0].mxu0
    %1071 = vmatprep.mubr.f32.mxu0 0.0
    %v1072 = vand.u32 %v762, 4294901760
    %1073 = vmatmul.mubr.f32.gmra.mrb[0].mxu0 %v1072
    %v1074 = vpop.f32.mrb[0].mxu0
    %v1075 = vadd.f32 %v878, %v1074
    %v1076 = vpop.f32.mrb[0].mxu0
    %1077 = vmatprep.mubr.f32.mxu0 0.0
    %v1078 = vand.u32 %v765, 4294901760
    %1079 = vmatmul.mubr.f32.gmra.mrb[0].mxu0 %v1078
    %v1080 = vpop.f32.mrb[0].mxu0
    %v1081 = vadd.f32 %v888, %v1080
    %v1082 = vpop.f32.mrb[0].mxu0
    %1083 = vmatprep.mubr.f32.mxu0 0.0
    %v1084 = vand.u32 %v768, 4294901760
    %1085 = vmatmul.mubr.f32.gmra.mrb[0].mxu0 %v1084
    %v1086 = vpop.f32.mrb[0].mxu0
    %v1087 = vadd.f32 %v898, %v1086
    %v1088 = vpop.f32.mrb[0].mxu0
    %1089 = vmatprep.mubr.f32.mxu0 0.0
    %v1090 = vand.u32 %v771, 4294901760
    %1091 = vmatmul.mubr.f32.gmra.mrb[0].mxu0 %v1090
    %v1092 = vpop.f32.mrb[0].mxu0
    %v1093 = vadd.f32 %v908, %v1092
    %v1094 = vpop.f32.mrb[0].mxu0
    %1095 = vmatprep.mubr.f32.mxu0 0.0
    %v1096 = vand.u32 %v774, 4294901760
    %1097 = vmatmul.mubr.f32.gmra.mrb[0].mxu0 %v1096
    %v1098 = vpop.f32.mrb[0].mxu0
    %v1099 = vadd.f32 %v918, %v1098
    %v1100 = vpop.f32.mrb[0].mxu0
    %1101 = vmatprep.mubr.f32.mxu0 0.0
    %v1102 = vand.u32 %v777, 4294901760
    %1103 = vmatmul.mubr.f32.gmra.mrb[0].mxu0 %v1102
    %v1104 = vpop.f32.mrb[0].mxu0
    %v1105 = vadd.f32 %v928, %v1104
    %v1106 = vpop.f32.mrb[0].mxu0
    %1107 = vmatprep.mubr.f32.mxu0 0.0
    %v1108 = vand.u32 %v780, 4294901760
    %1109 = vmatmul.mubr.f32.gmra.mrb[0].mxu0 %v1108
    %v1110 = vpop.f32.mrb[0].mxu0
    %v1111 = vadd.f32 %v938, %v1110
    %v1112 = vpop.f32.mrb[0].mxu0
    %1113 = vmatprep.mubr.f32.mxu0 0.0
    %v1114 = vand.u32 %v783, 4294901760
    %1115 = vmatmul.mubr.f32.gmra.mrb[0].mxu0 %v1114
    %v1116 = vpop.f32.mrb[0].mxu0
    %v1117 = vadd.f32 %v948, %v1116
    %v1118 = vpop.f32.mrb[0].mxu0
    %1119 = vmatprep.mubr.f32.mxu0 0.0
    %v1120 = vand.u32 %v786, 4294901760
    %1121 = vmatmul.mubr.f32.gmra.mrb[0].mxu0 %v1120
    %v1122 = vpop.f32.mrb[0].mxu0
    %v1123 = vadd.f32 %v958, %v1122
    %v1124 = vpop.f32.mrb[0].mxu0
    %1125 = vdwg.mxu0
    %1126 = vmatprep.subr.mxu0 0.0
    %v1127 = vand.u32 %v29, 4294901760
    %v1128 = vsub.f32 %v29, %v1127
    %1129 = vmatpush1.msra.mxu0 %v1128
    %1130 = vmatprep.subr.mxu0 0.0
    %v1131 = vand.u32 %v30, 4294901760
    %v1132 = vsub.f32 %v30, %v1131
    %1133 = vmatpush1.msra.mxu0 %v1132
    %1134 = vmatprep.subr.mxu0 0.0
    %v1135 = vand.u32 %v31, 4294901760
    %v1136 = vsub.f32 %v31, %v1135
    %1137 = vmatpush1.msra.mxu0 %v1136
    %1138 = vmatprep.subr.mxu0 0.0
    %v1139 = vand.u32 %v32, 4294901760
    %v1140 = vsub.f32 %v32, %v1139
    %1141 = vmatpush1.msra.mxu0 %v1140
    %1142 = vmatprep.subr.mxu0 0.0
    %v1143 = vand.u32 %v33, 4294901760
    %v1144 = vsub.f32 %v33, %v1143
    %1145 = vmatpush1.msra.mxu0 %v1144
    %1146 = vmatprep.subr.mxu0 0.0
    %v1147 = vand.u32 %v34, 4294901760
    %v1148 = vsub.f32 %v34, %v1147
    %1149 = vmatpush1.msra.mxu0 %v1148
    %1150 = vmatprep.subr.mxu0 0.0
    %v1151 = vand.u32 %v35, 4294901760
    %v1152 = vsub.f32 %v35, %v1151
    %1153 = vmatpush1.msra.mxu0 %v1152
    %1154 = vmatprep.subr.mxu0 0.0
    %v1155 = vand.u32 %v36, 4294901760
    %v1156 = vsub.f32 %v36, %v1155
    %1157 = vmatpush1.msra.mxu0 %v1156
    %1158 = vmatprep.subr.mxu0 0.0
    %1159 = vmatpush1.msra.mxu0 0.0
    %1160 = vmatprep.subr.mxu0 0.0
    %1161 = vmatpush1.msra.mxu0 0.0
    %1162 = vmatprep.subr.mxu0 0.0
    %1163 = vmatpush1.msra.mxu0 0.0
    %1164 = vmatprep.subr.mxu0 0.0
    %1165 = vmatpush1.msra.mxu0 0.0
    %1166 = vmatprep.subr.mxu0 0.0
    %1167 = vmatpush1.msra.mxu0 0.0
    %1168 = vmatprep.subr.mxu0 0.0
    %1169 = vmatpush1.msra.mxu0 0.0
    %1170 = vmatprep.subr.mxu0 0.0
    %1171 = vmatpush1.msra.mxu0 0.0
    %1172 = vmatprep.subr.mxu0 0.0
    %1173 = vmatpush1.msra.mxu0 0.0
    %1174 = vmatprep.subr.mxu0 0.0
    %1175 = vmatpush1.msra.mxu0 0.0
    %1176 = vmatprep.subr.mxu0 0.0
    %1177 = vmatpush1.msra.mxu0 0.0
    %1178 = vmatprep.subr.mxu0 0.0
    %1179 = vmatpush1.msra.mxu0 0.0
    %1180 = vmatprep.subr.mxu0 0.0
    %1181 = vmatpush1.msra.mxu0 0.0
    %1182 = vmatprep.subr.mxu0 0.0
    %1183 = vmatpush1.msra.mxu0 0.0
    %1184 = vmatprep.subr.mxu0 0.0
    %1185 = vmatpush1.msra.mxu0 0.0
    %1186 = vmatprep.subr.mxu0 0.0
    %1187 = vmatpush1.msra.mxu0 0.0
    %1188 = vmatprep.subr.mxu0 0.0
    %1189 = vmatpush1.msra.mxu0 0.0
    %1190 = vmatprep.subr.mxu0 0.0
    %1191 = vmatpush1.msra.mxu0 0.0
    %1192 = vmatprep.subr.mxu0 0.0
    %1193 = vmatpush1.msra.mxu0 0.0
    %1194 = vmatprep.subr.mxu0 0.0
    %1195 = vmatpush1.msra.mxu0 0.0
    %1196 = vmatprep.subr.mxu0 0.0
    %1197 = vmatpush1.msra.mxu0 0.0
    %1198 = vmatprep.subr.mxu0 0.0
    %1199 = vmatpush1.msra.mxu0 0.0
    %1200 = vmatprep.subr.mxu0 0.0
    %1201 = vmatpush1.msra.mxu0 0.0
    %1202 = vmatprep.subr.mxu0 0.0
    %1203 = vmatpush1.msra.mxu0 0.0
    %1204 = vmatprep.subr.mxu0 0.0
    %1205 = vmatpush1.msra.mxu0 0.0
    %1206 = vmatprep.mubr.f32.mxu0 0.0
    %v1207 = vand.u32 %v759, 4294901760
    %v1208 = vsub.f32 %v759, %v1207
    %1209 = vmatmul.mubr.f32.gmra.mrb[0].mxu0 %v1208
    %v1210 = vpop.f32.mrb[0].mxu0
    %v1211 = vadd.f32 %v1069, %v1210
    %v1212 = vpop.f32.mrb[0].mxu0
    %1213 = vmatprep.mubr.f32.mxu0 0.0
    %v1214 = vand.u32 %v762, 4294901760
    %v1215 = vsub.f32 %v762, %v1214
    %1216 = vmatmul.mubr.f32.gmra.mrb[0].mxu0 %v1215
    %v1217 = vpop.f32.mrb[0].mxu0
    %v1218 = vadd.f32 %v1075, %v1217
    %v1219 = vpop.f32.mrb[0].mxu0
    %1220 = vmatprep.mubr.f32.mxu0 0.0
    %v1221 = vand.u32 %v765, 4294901760
    %v1222 = vsub.f32 %v765, %v1221
    %1223 = vmatmul.mubr.f32.gmra.mrb[0].mxu0 %v1222
    %v1224 = vpop.f32.mrb[0].mxu0
    %v1225 = vadd.f32 %v1081, %v1224
    %v1226 = vpop.f32.mrb[0].mxu0
    %1227 = vmatprep.mubr.f32.mxu0 0.0
    %v1228 = vand.u32 %v768, 4294901760
    %v1229 = vsub.f32 %v768, %v1228
    %1230 = vmatmul.mubr.f32.gmra.mrb[0].mxu0 %v1229
    %v1231 = vpop.f32.mrb[0].mxu0
    %v1232 = vadd.f32 %v1087, %v1231
    %v1233 = vpop.f32.mrb[0].mxu0
    %1234 = vmatprep.mubr.f32.mxu0 0.0
    %v1235 = vand.u32 %v771, 4294901760
    %v1236 = vsub.f32 %v771, %v1235
    %1237 = vmatmul.mubr.f32.gmra.mrb[0].mxu0 %v1236
    %v1238 = vpop.f32.mrb[0].mxu0
    %v1239 = vadd.f32 %v1093, %v1238
    %v1240 = vpop.f32.mrb[0].mxu0
    %1241 = vmatprep.mubr.f32.mxu0 0.0
    %v1242 = vand.u32 %v774, 4294901760
    %v1243 = vsub.f32 %v774, %v1242
    %1244 = vmatmul.mubr.f32.gmra.mrb[0].mxu0 %v1243
    %v1245 = vpop.f32.mrb[0].mxu0
    %v1246 = vadd.f32 %v1099, %v1245
    %v1247 = vpop.f32.mrb[0].mxu0
    %1248 = vmatprep.mubr.f32.mxu0 0.0
    %v1249 = vand.u32 %v777, 4294901760
    %v1250 = vsub.f32 %v777, %v1249
    %1251 = vmatmul.mubr.f32.gmra.mrb[0].mxu0 %v1250
    %v1252 = vpop.f32.mrb[0].mxu0
    %v1253 = vadd.f32 %v1105, %v1252
    %v1254 = vpop.f32.mrb[0].mxu0
    %1255 = vmatprep.mubr.f32.mxu0 0.0
    %v1256 = vand.u32 %v780, 4294901760
    %v1257 = vsub.f32 %v780, %v1256
    %1258 = vmatmul.mubr.f32.gmra.mrb[0].mxu0 %v1257
    %v1259 = vpop.f32.mrb[0].mxu0
    %v1260 = vadd.f32 %v1111, %v1259
    %v1261 = vpop.f32.mrb[0].mxu0
    %1262 = vmatprep.mubr.f32.mxu0 0.0
    %v1263 = vand.u32 %v783, 4294901760
    %v1264 = vsub.f32 %v783, %v1263
    %1265 = vmatmul.mubr.f32.gmra.mrb[0].mxu0 %v1264
    %v1266 = vpop.f32.mrb[0].mxu0
    %v1267 = vadd.f32 %v1117, %v1266
    %v1268 = vpop.f32.mrb[0].mxu0
    %1269 = vmatprep.mubr.f32.mxu0 0.0
    %v1270 = vand.u32 %v786, 4294901760
    %v1271 = vsub.f32 %v786, %v1270
    %1272 = vmatmul.mubr.f32.gmra.mrb[0].mxu0 %v1271
    %v1273 = vpop.f32.mrb[0].mxu0
    %v1274 = vadd.f32 %v1123, %v1273
    %v1275 = vpop.f32.mrb[0].mxu0
    %1276 = vdwg.mxu0
    %1277 = vmatprep.subr.mxu0 0.0
    %v1278 = vand.u32 %v29, 4294901760
    %1279 = vmatpush1.msra.mxu0 %v1278
    %1280 = vmatprep.subr.mxu0 0.0
    %v1281 = vand.u32 %v30, 4294901760
    %1282 = vmatpush1.msra.mxu0 %v1281
    %1283 = vmatprep.subr.mxu0 0.0
    %v1284 = vand.u32 %v31, 4294901760
    %1285 = vmatpush1.msra.mxu0 %v1284
    %1286 = vmatprep.subr.mxu0 0.0
    %v1287 = vand.u32 %v32, 4294901760
    %1288 = vmatpush1.msra.mxu0 %v1287
    %1289 = vmatprep.subr.mxu0 0.0
    %v1290 = vand.u32 %v33, 4294901760
    %1291 = vmatpush1.msra.mxu0 %v1290
    %1292 = vmatprep.subr.mxu0 0.0
    %v1293 = vand.u32 %v34, 4294901760
    %1294 = vmatpush1.msra.mxu0 %v1293
    %1295 = vmatprep.subr.mxu0 0.0
    %v1296 = vand.u32 %v35, 4294901760
    %1297 = vmatpush1.msra.mxu0 %v1296
    %1298 = vmatprep.subr.mxu0 0.0
    %v1299 = vand.u32 %v36, 4294901760
    %1300 = vmatpush1.msra.mxu0 %v1299
    %1301 = vmatprep.subr.mxu0 0.0
    %1302 = vmatpush1.msra.mxu0 0.0
    %1303 = vmatprep.subr.mxu0 0.0
    %1304 = vmatpush1.msra.mxu0 0.0
    %1305 = vmatprep.subr.mxu0 0.0
    %1306 = vmatpush1.msra.mxu0 0.0
    %1307 = vmatprep.subr.mxu0 0.0
    %1308 = vmatpush1.msra.mxu0 0.0
    %1309 = vmatprep.subr.mxu0 0.0
    %1310 = vmatpush1.msra.mxu0 0.0
    %1311 = vmatprep.subr.mxu0 0.0
    %1312 = vmatpush1.msra.mxu0 0.0
    %1313 = vmatprep.subr.mxu0 0.0
    %1314 = vmatpush1.msra.mxu0 0.0
    %1315 = vmatprep.subr.mxu0 0.0
    %1316 = vmatpush1.msra.mxu0 0.0
    %1317 = vmatprep.subr.mxu0 0.0
    %1318 = vmatpush1.msra.mxu0 0.0
    %1319 = vmatprep.subr.mxu0 0.0
    %1320 = vmatpush1.msra.mxu0 0.0
    %1321 = vmatprep.subr.mxu0 0.0
    %1322 = vmatpush1.msra.mxu0 0.0
    %1323 = vmatprep.subr.mxu0 0.0
    %1324 = vmatpush1.msra.mxu0 0.0
    %1325 = vmatprep.subr.mxu0 0.0
    %1326 = vmatpush1.msra.mxu0 0.0
    %1327 = vmatprep.subr.mxu0 0.0
    %1328 = vmatpush1.msra.mxu0 0.0
    %1329 = vmatprep.subr.mxu0 0.0
    %1330 = vmatpush1.msra.mxu0 0.0
    %1331 = vmatprep.subr.mxu0 0.0
    %1332 = vmatpush1.msra.mxu0 0.0
    %1333 = vmatprep.subr.mxu0 0.0
    %1334 = vmatpush1.msra.mxu0 0.0
    %1335 = vmatprep.subr.mxu0 0.0
    %1336 = vmatpush1.msra.mxu0 0.0
    %1337 = vmatprep.subr.mxu0 0.0
    %1338 = vmatpush1.msra.mxu0 0.0
    %1339 = vmatprep.subr.mxu0 0.0
    %1340 = vmatpush1.msra.mxu0 0.0
    %1341 = vmatprep.subr.mxu0 0.0
    %1342 = vmatpush1.msra.mxu0 0.0
    %1343 = vmatprep.subr.mxu0 0.0
    %1344 = vmatpush1.msra.mxu0 0.0
    %1345 = vmatprep.subr.mxu0 0.0
    %1346 = vmatpush1.msra.mxu0 0.0
    %1347 = vmatprep.subr.mxu0 0.0
    %1348 = vmatpush1.msra.mxu0 0.0
    %1349 = vmatprep.mubr.f32.mxu0 0.0
    %v1350 = vand.u32 %v759, 4294901760
    %v1351 = vsub.f32 %v759, %v1350
    %v1352 = vand.u32 %v1351, 4294901760
    %1353 = vmatmul.mubr.f32.gmra.mrb[0].mxu0 %v1352
    %v1354 = vpop.f32.mrb[0].mxu0
    %v1355 = vadd.f32 %v1211, %v1354
    %v1356 = vpop.f32.mrb[0].mxu0
    %1357 = vmatprep.mubr.f32.mxu0 0.0
    %v1358 = vand.u32 %v762, 4294901760
    %v1359 = vsub.f32 %v762, %v1358
    %v1360 = vand.u32 %v1359, 4294901760
    %1361 = vmatmul.mubr.f32.gmra.mrb[0].mxu0 %v1360
    %v1362 = vpop.f32.mrb[0].mxu0
    %v1363 = vadd.f32 %v1218, %v1362
    %v1364 = vpop.f32.mrb[0].mxu0
    %1365 = vmatprep.mubr.f32.mxu0 0.0
    %v1366 = vand.u32 %v765, 4294901760
    %v1367 = vsub.f32 %v765, %v1366
    %v1368 = vand.u32 %v1367, 4294901760
    %1369 = vmatmul.mubr.f32.gmra.mrb[0].mxu0 %v1368
    %v1370 = vpop.f32.mrb[0].mxu0
    %v1371 = vadd.f32 %v1225, %v1370
    %v1372 = vpop.f32.mrb[0].mxu0
    %1373 = vmatprep.mubr.f32.mxu0 0.0
    %v1374 = vand.u32 %v768, 4294901760
    %v1375 = vsub.f32 %v768, %v1374
    %v1376 = vand.u32 %v1375, 4294901760
    %1377 = vmatmul.mubr.f32.gmra.mrb[0].mxu0 %v1376
    %v1378 = vpop.f32.mrb[0].mxu0
    %v1379 = vadd.f32 %v1232, %v1378
    %v1380 = vpop.f32.mrb[0].mxu0
    %1381 = vmatprep.mubr.f32.mxu0 0.0
    %v1382 = vand.u32 %v771, 4294901760
    %v1383 = vsub.f32 %v771, %v1382
    %v1384 = vand.u32 %v1383, 4294901760
    %1385 = vmatmul.mubr.f32.gmra.mrb[0].mxu0 %v1384
    %v1386 = vpop.f32.mrb[0].mxu0
    %v1387 = vadd.f32 %v1239, %v1386
    %v1388 = vpop.f32.mrb[0].mxu0
    %1389 = vmatprep.mubr.f32.mxu0 0.0
    %v1390 = vand.u32 %v774, 4294901760
    %v1391 = vsub.f32 %v774, %v1390
    %v1392 = vand.u32 %v1391, 4294901760
    %1393 = vmatmul.mubr.f32.gmra.mrb[0].mxu0 %v1392
    %v1394 = vpop.f32.mrb[0].mxu0
    %v1395 = vadd.f32 %v1246, %v1394
    %v1396 = vpop.f32.mrb[0].mxu0
    %1397 = vmatprep.mubr.f32.mxu0 0.0
    %v1398 = vand.u32 %v777, 4294901760
    %v1399 = vsub.f32 %v777, %v1398
    %v1400 = vand.u32 %v1399, 4294901760
    %1401 = vmatmul.mubr.f32.gmra.mrb[0].mxu0 %v1400
    %v1402 = vpop.f32.mrb[0].mxu0
    %v1403 = vadd.f32 %v1253, %v1402
    %v1404 = vpop.f32.mrb[0].mxu0
    %1405 = vmatprep.mubr.f32.mxu0 0.0
    %v1406 = vand.u32 %v780, 4294901760
    %v1407 = vsub.f32 %v780, %v1406
    %v1408 = vand.u32 %v1407, 4294901760
    %1409 = vmatmul.mubr.f32.gmra.mrb[0].mxu0 %v1408
    %v1410 = vpop.f32.mrb[0].mxu0
    %v1411 = vadd.f32 %v1260, %v1410
    %v1412 = vpop.f32.mrb[0].mxu0
    %1413 = vmatprep.mubr.f32.mxu0 0.0
    %v1414 = vand.u32 %v783, 4294901760
    %v1415 = vsub.f32 %v783, %v1414
    %v1416 = vand.u32 %v1415, 4294901760
    %1417 = vmatmul.mubr.f32.gmra.mrb[0].mxu0 %v1416
    %v1418 = vpop.f32.mrb[0].mxu0
    %v1419 = vadd.f32 %v1267, %v1418
    %v1420 = vpop.f32.mrb[0].mxu0
    %1421 = vmatprep.mubr.f32.mxu0 0.0
    %v1422 = vand.u32 %v786, 4294901760
    %v1423 = vsub.f32 %v786, %v1422
    %v1424 = vand.u32 %v1423, 4294901760
    %1425 = vmatmul.mubr.f32.gmra.mrb[0].mxu0 %v1424
    %v1426 = vpop.f32.mrb[0].mxu0
    %v1427 = vadd.f32 %v1274, %v1426
    %v1428 = vpop.f32.mrb[0].mxu0
    %1429 = vdwg.mxu0
    %1430 = vmatprep.subr.mxu0 0.0
    %v1431 = vand.u32 %v29, 4294901760
    %v1432 = vsub.f32 %v29, %v1431
    %v1433 = vand.u32 %v1432, 4294901760
    %1434 = vmatpush1.msra.mxu0 %v1433
    %1435 = vmatprep.subr.mxu0 0.0
    %v1436 = vand.u32 %v30, 4294901760
    %v1437 = vsub.f32 %v30, %v1436
    %v1438 = vand.u32 %v1437, 4294901760
    %1439 = vmatpush1.msra.mxu0 %v1438
    %1440 = vmatprep.subr.mxu0 0.0
    %v1441 = vand.u32 %v31, 4294901760
    %v1442 = vsub.f32 %v31, %v1441
    %v1443 = vand.u32 %v1442, 4294901760
    %1444 = vmatpush1.msra.mxu0 %v1443
    %1445 = vmatprep.subr.mxu0 0.0
    %v1446 = vand.u32 %v32, 4294901760
    %v1447 = vsub.f32 %v32, %v1446
    %v1448 = vand.u32 %v1447, 4294901760
    %1449 = vmatpush1.msra.mxu0 %v1448
    %1450 = vmatprep.subr.mxu0 0.0
    %v1451 = vand.u32 %v33, 4294901760
    %v1452 = vsub.f32 %v33, %v1451
    %v1453 = vand.u32 %v1452, 4294901760
    %1454 = vmatpush1.msra.mxu0 %v1453
    %1455 = vmatprep.subr.mxu0 0.0
    %v1456 = vand.u32 %v34, 4294901760
    %v1457 = vsub.f32 %v34, %v1456
    %v1458 = vand.u32 %v1457, 4294901760
    %1459 = vmatpush1.msra.mxu0 %v1458
    %1460 = vmatprep.subr.mxu0 0.0
    %v1461 = vand.u32 %v35, 4294901760
    %v1462 = vsub.f32 %v35, %v1461
    %v1463 = vand.u32 %v1462, 4294901760
    %1464 = vmatpush1.msra.mxu0 %v1463
    %1465 = vmatprep.subr.mxu0 0.0
    %v1466 = vand.u32 %v36, 4294901760
    %v1467 = vsub.f32 %v36, %v1466
    %v1468 = vand.u32 %v1467, 4294901760
    %1469 = vmatpush1.msra.mxu0 %v1468
    %1470 = vmatprep.subr.mxu0 0.0
    %1471 = vmatpush1.msra.mxu0 0.0
    %1472 = vmatprep.subr.mxu0 0.0
    %1473 = vmatpush1.msra.mxu0 0.0
    %1474 = vmatprep.subr.mxu0 0.0
    %1475 = vmatpush1.msra.mxu0 0.0
    %1476 = vmatprep.subr.mxu0 0.0
    %1477 = vmatpush1.msra.mxu0 0.0
    %1478 = vmatprep.subr.mxu0 0.0
    %1479 = vmatpush1.msra.mxu0 0.0
    %1480 = vmatprep.subr.mxu0 0.0
    %1481 = vmatpush1.msra.mxu0 0.0
    %1482 = vmatprep.subr.mxu0 0.0
    %1483 = vmatpush1.msra.mxu0 0.0
    %1484 = vmatprep.subr.mxu0 0.0
    %1485 = vmatpush1.msra.mxu0 0.0
    %1486 = vmatprep.subr.mxu0 0.0
    %1487 = vmatpush1.msra.mxu0 0.0
    %1488 = vmatprep.subr.mxu0 0.0
    %1489 = vmatpush1.msra.mxu0 0.0
    %1490 = vmatprep.subr.mxu0 0.0
    %1491 = vmatpush1.msra.mxu0 0.0
    %1492 = vmatprep.subr.mxu0 0.0
    %1493 = vmatpush1.msra.mxu0 0.0
    %1494 = vmatprep.subr.mxu0 0.0
    %1495 = vmatpush1.msra.mxu0 0.0
    %1496 = vmatprep.subr.mxu0 0.0
    %1497 = vmatpush1.msra.mxu0 0.0
    %1498 = vmatprep.subr.mxu0 0.0
    %1499 = vmatpush1.msra.mxu0 0.0
    %1500 = vmatprep.subr.mxu0 0.0
    %1501 = vmatpush1.msra.mxu0 0.0
    %1502 = vmatprep.subr.mxu0 0.0
    %1503 = vmatpush1.msra.mxu0 0.0
    %1504 = vmatprep.subr.mxu0 0.0
    %1505 = vmatpush1.msra.mxu0 0.0
    %1506 = vmatprep.subr.mxu0 0.0
    %1507 = vmatpush1.msra.mxu0 0.0
    %1508 = vmatprep.subr.mxu0 0.0
    %1509 = vmatpush1.msra.mxu0 0.0
    %1510 = vmatprep.subr.mxu0 0.0
    %1511 = vmatpush1.msra.mxu0 0.0
    %1512 = vmatprep.subr.mxu0 0.0
    %1513 = vmatpush1.msra.mxu0 0.0
    %1514 = vmatprep.subr.mxu0 0.0
    %1515 = vmatpush1.msra.mxu0 0.0
    %1516 = vmatprep.subr.mxu0 0.0
    %1517 = vmatpush1.msra.mxu0 0.0
    %1518 = vmatprep.mubr.f32.mxu0 0.0
    %v1519 = vand.u32 %v759, 4294901760
    %1520 = vmatmul.mubr.f32.gmra.mrb[0].mxu0 %v1519
    %v1521 = vpop.f32.mrb[0].mxu0
    %v1522 = vadd.f32 %v1355, %v1521
    %v1523 = vpop.f32.mrb[0].mxu0
    %1524 = vmatprep.mubr.f32.mxu0 0.0
    %v1525 = vand.u32 %v762, 4294901760
    %1526 = vmatmul.mubr.f32.gmra.mrb[0].mxu0 %v1525
    %v1527 = vpop.f32.mrb[0].mxu0
    %v1528 = vadd.f32 %v1363, %v1527
    %v1529 = vpop.f32.mrb[0].mxu0
    %1530 = vmatprep.mubr.f32.mxu0 0.0
    %v1531 = vand.u32 %v765, 4294901760
    %1532 = vmatmul.mubr.f32.gmra.mrb[0].mxu0 %v1531
    %v1533 = vpop.f32.mrb[0].mxu0
    %v1534 = vadd.f32 %v1371, %v1533
    %v1535 = vpop.f32.mrb[0].mxu0
    %1536 = vmatprep.mubr.f32.mxu0 0.0
    %v1537 = vand.u32 %v768, 4294901760
    %1538 = vmatmul.mubr.f32.gmra.mrb[0].mxu0 %v1537
    %v1539 = vpop.f32.mrb[0].mxu0
    %v1540 = vadd.f32 %v1379, %v1539
    %v1541 = vpop.f32.mrb[0].mxu0
    %1542 = vmatprep.mubr.f32.mxu0 0.0
    %v1543 = vand.u32 %v771, 4294901760
    %1544 = vmatmul.mubr.f32.gmra.mrb[0].mxu0 %v1543
    %v1545 = vpop.f32.mrb[0].mxu0
    %v1546 = vadd.f32 %v1387, %v1545
    %v1547 = vpop.f32.mrb[0].mxu0
    %1548 = vmatprep.mubr.f32.mxu0 0.0
    %v1549 = vand.u32 %v774, 4294901760
    %1550 = vmatmul.mubr.f32.gmra.mrb[0].mxu0 %v1549
    %v1551 = vpop.f32.mrb[0].mxu0
    %v1552 = vadd.f32 %v1395, %v1551
    %v1553 = vpop.f32.mrb[0].mxu0
    %1554 = vmatprep.mubr.f32.mxu0 0.0
    %v1555 = vand.u32 %v777, 4294901760
    %1556 = vmatmul.mubr.f32.gmra.mrb[0].mxu0 %v1555
    %v1557 = vpop.f32.mrb[0].mxu0
    %v1558 = vadd.f32 %v1403, %v1557
    %v1559 = vpop.f32.mrb[0].mxu0
    %1560 = vmatprep.mubr.f32.mxu0 0.0
    %v1561 = vand.u32 %v780, 4294901760
    %1562 = vmatmul.mubr.f32.gmra.mrb[0].mxu0 %v1561
    %v1563 = vpop.f32.mrb[0].mxu0
    %v1564 = vadd.f32 %v1411, %v1563
    %v1565 = vpop.f32.mrb[0].mxu0
    %1566 = vmatprep.mubr.f32.mxu0 0.0
    %v1567 = vand.u32 %v783, 4294901760
    %1568 = vmatmul.mubr.f32.gmra.mrb[0].mxu0 %v1567
    %v1569 = vpop.f32.mrb[0].mxu0
    %v1570 = vadd.f32 %v1419, %v1569
    %v1571 = vpop.f32.mrb[0].mxu0
    %1572 = vmatprep.mubr.f32.mxu0 0.0
    %v1573 = vand.u32 %v786, 4294901760
    %1574 = vmatmul.mubr.f32.gmra.mrb[0].mxu0 %v1573
    %v1575 = vpop.f32.mrb[0].mxu0
    %v1576 = vadd.f32 %v1427, %v1575
    %v1577 = vpop.f32.mrb[0].mxu0
    %1578 = vdwg.mxu0
    %1579 = vmatprep.subr.mxu0 0.0
    %v1580 = vand.u32 %v29, 4294901760
    %1581 = vmatpush1.msra.mxu0 %v1580
    %1582 = vmatprep.subr.mxu0 0.0
    %v1583 = vand.u32 %v30, 4294901760
    %1584 = vmatpush1.msra.mxu0 %v1583
    %1585 = vmatprep.subr.mxu0 0.0
    %v1586 = vand.u32 %v31, 4294901760
    %1587 = vmatpush1.msra.mxu0 %v1586
    %1588 = vmatprep.subr.mxu0 0.0
    %v1589 = vand.u32 %v32, 4294901760
    %1590 = vmatpush1.msra.mxu0 %v1589
    %1591 = vmatprep.subr.mxu0 0.0
    %v1592 = vand.u32 %v33, 4294901760
    %1593 = vmatpush1.msra.mxu0 %v1592
    %1594 = vmatprep.subr.mxu0 0.0
    %v1595 = vand.u32 %v34, 4294901760
    %1596 = vmatpush1.msra.mxu0 %v1595
    %1597 = vmatprep.subr.mxu0 0.0
    %v1598 = vand.u32 %v35, 4294901760
    %1599 = vmatpush1.msra.mxu0 %v1598
    %1600 = vmatprep.subr.mxu0 0.0
    %v1601 = vand.u32 %v36, 4294901760
    %1602 = vmatpush1.msra.mxu0 %v1601
    %1603 = vmatprep.subr.mxu0 0.0
    %1604 = vmatpush1.msra.mxu0 0.0
    %1605 = vmatprep.subr.mxu0 0.0
    %1606 = vmatpush1.msra.mxu0 0.0
    %1607 = vmatprep.subr.mxu0 0.0
    %1608 = vmatpush1.msra.mxu0 0.0
    %1609 = vmatprep.subr.mxu0 0.0
    %1610 = vmatpush1.msra.mxu0 0.0
    %1611 = vmatprep.subr.mxu0 0.0
    %1612 = vmatpush1.msra.mxu0 0.0
    %1613 = vmatprep.subr.mxu0 0.0
    %1614 = vmatpush1.msra.mxu0 0.0
    %1615 = vmatprep.subr.mxu0 0.0
    %1616 = vmatpush1.msra.mxu0 0.0
    %1617 = vmatprep.subr.mxu0 0.0
    %1618 = vmatpush1.msra.mxu0 0.0
    %1619 = vmatprep.subr.mxu0 0.0
    %1620 = vmatpush1.msra.mxu0 0.0
    %1621 = vmatprep.subr.mxu0 0.0
    %1622 = vmatpush1.msra.mxu0 0.0
    %1623 = vmatprep.subr.mxu0 0.0
    %1624 = vmatpush1.msra.mxu0 0.0
    %1625 = vmatprep.subr.mxu0 0.0
    %1626 = vmatpush1.msra.mxu0 0.0
    %1627 = vmatprep.subr.mxu0 0.0
    %1628 = vmatpush1.msra.mxu0 0.0
    %1629 = vmatprep.subr.mxu0 0.0
    %1630 = vmatpush1.msra.mxu0 0.0
    %1631 = vmatprep.subr.mxu0 0.0
    %1632 = vmatpush1.msra.mxu0 0.0
    %1633 = vmatprep.subr.mxu0 0.0
    %1634 = vmatpush1.msra.mxu0 0.0
    %1635 = vmatprep.subr.mxu0 0.0
    %1636 = vmatpush1.msra.mxu0 0.0
    %1637 = vmatprep.subr.mxu0 0.0
    %1638 = vmatpush1.msra.mxu0 0.0
    %1639 = vmatprep.subr.mxu0 0.0
    %1640 = vmatpush1.msra.mxu0 0.0
    %1641 = vmatprep.subr.mxu0 0.0
    %1642 = vmatpush1.msra.mxu0 0.0
    %1643 = vmatprep.subr.mxu0 0.0
    %1644 = vmatpush1.msra.mxu0 0.0
    %1645 = vmatprep.subr.mxu0 0.0
    %1646 = vmatpush1.msra.mxu0 0.0
    %1647 = vmatprep.subr.mxu0 0.0
    %1648 = vmatpush1.msra.mxu0 0.0
    %1649 = vmatprep.subr.mxu0 0.0
    %1650 = vmatpush1.msra.mxu0 0.0
    %1651 = vmatprep.mubr.f32.mxu0 0.0
    %v1652 = vand.u32 %v759, 4294901760
    %1653 = vmatmul.mubr.f32.gmra.mrb[0].mxu0 %v1652
    %v1654 = vpop.f32.mrb[0].mxu0
    %v1655 = vadd.f32 %v1522, %v1654
    %v1656 = vpop.f32.mrb[0].mxu0
    %1657 = vmatprep.mubr.f32.mxu0 0.0
    %v1658 = vand.u32 %v762, 4294901760
    %1659 = vmatmul.mubr.f32.gmra.mrb[0].mxu0 %v1658
    %v1660 = vpop.f32.mrb[0].mxu0
    %v1661 = vadd.f32 %v1528, %v1660
    %v1662 = vpop.f32.mrb[0].mxu0
    %1663 = vmatprep.mubr.f32.mxu0 0.0
    %v1664 = vand.u32 %v765, 4294901760
    %1665 = vmatmul.mubr.f32.gmra.mrb[0].mxu0 %v1664
    %v1666 = vpop.f32.mrb[0].mxu0
    %v1667 = vadd.f32 %v1534, %v1666
    %v1668 = vpop.f32.mrb[0].mxu0
    %1669 = vmatprep.mubr.f32.mxu0 0.0
    %v1670 = vand.u32 %v768, 4294901760
    %1671 = vmatmul.mubr.f32.gmra.mrb[0].mxu0 %v1670
    %v1672 = vpop.f32.mrb[0].mxu0
    %v1673 = vadd.f32 %v1540, %v1672
    %v1674 = vpop.f32.mrb[0].mxu0
    %1675 = vmatprep.mubr.f32.mxu0 0.0
    %v1676 = vand.u32 %v771, 4294901760
    %1677 = vmatmul.mubr.f32.gmra.mrb[0].mxu0 %v1676
    %v1678 = vpop.f32.mrb[0].mxu0
    %v1679 = vadd.f32 %v1546, %v1678
    %v1680 = vpop.f32.mrb[0].mxu0
    %1681 = vmatprep.mubr.f32.mxu0 0.0
    %v1682 = vand.u32 %v774, 4294901760
    %1683 = vmatmul.mubr.f32.gmra.mrb[0].mxu0 %v1682
    %v1684 = vpop.f32.mrb[0].mxu0
    %v1685 = vadd.f32 %v1552, %v1684
    %v1686 = vpop.f32.mrb[0].mxu0
    %1687 = vmatprep.mubr.f32.mxu0 0.0
    %v1688 = vand.u32 %v777, 4294901760
    %1689 = vmatmul.mubr.f32.gmra.mrb[0].mxu0 %v1688
    %v1690 = vpop.f32.mrb[0].mxu0
    %v1691 = vadd.f32 %v1558, %v1690
    %v1692 = vpop.f32.mrb[0].mxu0
    %1693 = vmatprep.mubr.f32.mxu0 0.0
    %v1694 = vand.u32 %v780, 4294901760
    %1695 = vmatmul.mubr.f32.gmra.mrb[0].mxu0 %v1694
    %v1696 = vpop.f32.mrb[0].mxu0
    %v1697 = vadd.f32 %v1564, %v1696
    %v1698 = vpop.f32.mrb[0].mxu0
    %1699 = vmatprep.mubr.f32.mxu0 0.0
    %v1700 = vand.u32 %v783, 4294901760
    %1701 = vmatmul.mubr.f32.gmra.mrb[0].mxu0 %v1700
    %v1702 = vpop.f32.mrb[0].mxu0
    %v1703 = vadd.f32 %v1570, %v1702
    %v1704 = vpop.f32.mrb[0].mxu0
    %1705 = vmatprep.mubr.f32.mxu0 0.0
    %v1706 = vand.u32 %v786, 4294901760
    %1707 = vmatmul.mubr.f32.gmra.mrb[0].mxu0 %v1706
    %v1708 = vpop.f32.mrb[0].mxu0
    %v1709 = vadd.f32 %v1576, %v1708
    %v1710 = vpop.f32.mrb[0].mxu0
    %1711 = vdwg.mxu0
    %v1713 = vsel %vm233, %v748, 0
    %v1716 = vsel %vm233, %v749, 0
    %v1719 = vsel %vm233, %v750, 0
    %v1722 = vsel %vm233, %v751, 0
    %v1725 = vsel %vm233, %v752, 0
    %v1728 = vsel %vm233, %v753, 0
    %v1731 = vsel %vm233, %v754, 0
    %v1734 = vsel %vm233, %v755, 0
    %v1737 = vsel %vm233, %v756, 0
    %v1740 = vsel %vm233, %v757, 0
    %1742 = vmatprep.subr.mxu0 0.0
    %v1743 = vand.u32 %v37, 4294901760
    %1744 = vmatpush1.msra.mxu0 %v1743
    %1745 = vmatprep.subr.mxu0 0.0
    %v1746 = vand.u32 %v38, 4294901760
    %1747 = vmatpush1.msra.mxu0 %v1746
    %1748 = vmatprep.subr.mxu0 0.0
    %v1749 = vand.u32 %v39, 4294901760
    %1750 = vmatpush1.msra.mxu0 %v1749
    %1751 = vmatprep.subr.mxu0 0.0
    %v1752 = vand.u32 %v40, 4294901760
    %1753 = vmatpush1.msra.mxu0 %v1752
    %1754 = vmatprep.subr.mxu0 0.0
    %v1755 = vand.u32 %v41, 4294901760
    %1756 = vmatpush1.msra.mxu0 %v1755
    %1757 = vmatprep.subr.mxu0 0.0
    %v1758 = vand.u32 %v42, 4294901760
    %1759 = vmatpush1.msra.mxu0 %v1758
    %1760 = vmatprep.subr.mxu0 0.0
    %v1761 = vand.u32 %v43, 4294901760
    %1762 = vmatpush1.msra.mxu0 %v1761
    %1763 = vmatprep.subr.mxu0 0.0
    %v1764 = vand.u32 %v44, 4294901760
    %1765 = vmatpush1.msra.mxu0 %v1764
    %1766 = vmatprep.subr.mxu0 0.0
    %1767 = vmatpush1.msra.mxu0 0.0
    %1768 = vmatprep.subr.mxu0 0.0
    %1769 = vmatpush1.msra.mxu0 0.0
    %1770 = vmatprep.subr.mxu0 0.0
    %1771 = vmatpush1.msra.mxu0 0.0
    %1772 = vmatprep.subr.mxu0 0.0
    %1773 = vmatpush1.msra.mxu0 0.0
    %1774 = vmatprep.subr.mxu0 0.0
    %1775 = vmatpush1.msra.mxu0 0.0
    %1776 = vmatprep.subr.mxu0 0.0
    %1777 = vmatpush1.msra.mxu0 0.0
    %1778 = vmatprep.subr.mxu0 0.0
    %1779 = vmatpush1.msra.mxu0 0.0
    %1780 = vmatprep.subr.mxu0 0.0
    %1781 = vmatpush1.msra.mxu0 0.0
    %1782 = vmatprep.subr.mxu0 0.0
    %1783 = vmatpush1.msra.mxu0 0.0
    %1784 = vmatprep.subr.mxu0 0.0
    %1785 = vmatpush1.msra.mxu0 0.0
    %1786 = vmatprep.subr.mxu0 0.0
    %1787 = vmatpush1.msra.mxu0 0.0
    %1788 = vmatprep.subr.mxu0 0.0
    %1789 = vmatpush1.msra.mxu0 0.0
    %1790 = vmatprep.subr.mxu0 0.0
    %1791 = vmatpush1.msra.mxu0 0.0
    %1792 = vmatprep.subr.mxu0 0.0
    %1793 = vmatpush1.msra.mxu0 0.0
    %1794 = vmatprep.subr.mxu0 0.0
    %1795 = vmatpush1.msra.mxu0 0.0
    %1796 = vmatprep.subr.mxu0 0.0
    %1797 = vmatpush1.msra.mxu0 0.0
    %1798 = vmatprep.subr.mxu0 0.0
    %1799 = vmatpush1.msra.mxu0 0.0
    %1800 = vmatprep.subr.mxu0 0.0
    %1801 = vmatpush1.msra.mxu0 0.0
    %1802 = vmatprep.subr.mxu0 0.0
    %1803 = vmatpush1.msra.mxu0 0.0
    %1804 = vmatprep.subr.mxu0 0.0
    %1805 = vmatpush1.msra.mxu0 0.0
    %1806 = vmatprep.subr.mxu0 0.0
    %1807 = vmatpush1.msra.mxu0 0.0
    %1808 = vmatprep.subr.mxu0 0.0
    %1809 = vmatpush1.msra.mxu0 0.0
    %1810 = vmatprep.subr.mxu0 0.0
    %1811 = vmatpush1.msra.mxu0 0.0
    %1812 = vmatprep.subr.mxu0 0.0
    %1813 = vmatpush1.msra.mxu0 0.0
    %1814 = vmatprep.mubr.f32.mxu0 0.0
    %v1815 = vand.u32 %v1713, 4294901760
    %v1816 = vsub.f32 %v1713, %v1815
    %v1817 = vand.u32 %v1816, 4294901760
    %v1818 = vsub.f32 %v1816, %v1817
    %v1819 = vand.u32 %v1818, 4294901760
    %1820 = vmatmul.mubr.f32.gmra.mrb[0].mxu0 %v1819
    %v1821 = vpop.f32.mrb[0].mxu0
    %v1822 = vadd.f32 0.0, %v1821
    %v1823 = vpop.f32.mrb[0].mxu0
    %1824 = vmatprep.mubr.f32.mxu0 0.0
    %v1825 = vand.u32 %v1716, 4294901760
    %v1826 = vsub.f32 %v1716, %v1825
    %v1827 = vand.u32 %v1826, 4294901760
    %v1828 = vsub.f32 %v1826, %v1827
    %v1829 = vand.u32 %v1828, 4294901760
    %1830 = vmatmul.mubr.f32.gmra.mrb[0].mxu0 %v1829
    %v1831 = vpop.f32.mrb[0].mxu0
    %v1832 = vadd.f32 0.0, %v1831
    %v1833 = vpop.f32.mrb[0].mxu0
    %1834 = vmatprep.mubr.f32.mxu0 0.0
    %v1835 = vand.u32 %v1719, 4294901760
    %v1836 = vsub.f32 %v1719, %v1835
    %v1837 = vand.u32 %v1836, 4294901760
    %v1838 = vsub.f32 %v1836, %v1837
    %v1839 = vand.u32 %v1838, 4294901760
    %1840 = vmatmul.mubr.f32.gmra.mrb[0].mxu0 %v1839
    %v1841 = vpop.f32.mrb[0].mxu0
    %v1842 = vadd.f32 0.0, %v1841
    %v1843 = vpop.f32.mrb[0].mxu0
    %1844 = vmatprep.mubr.f32.mxu0 0.0
    %v1845 = vand.u32 %v1722, 4294901760
    %v1846 = vsub.f32 %v1722, %v1845
    %v1847 = vand.u32 %v1846, 4294901760
    %v1848 = vsub.f32 %v1846, %v1847
    %v1849 = vand.u32 %v1848, 4294901760
    %1850 = vmatmul.mubr.f32.gmra.mrb[0].mxu0 %v1849
    %v1851 = vpop.f32.mrb[0].mxu0
    %v1852 = vadd.f32 0.0, %v1851
    %v1853 = vpop.f32.mrb[0].mxu0
    %1854 = vmatprep.mubr.f32.mxu0 0.0
    %v1855 = vand.u32 %v1725, 4294901760
    %v1856 = vsub.f32 %v1725, %v1855
    %v1857 = vand.u32 %v1856, 4294901760
    %v1858 = vsub.f32 %v1856, %v1857
    %v1859 = vand.u32 %v1858, 4294901760
    %1860 = vmatmul.mubr.f32.gmra.mrb[0].mxu0 %v1859
    %v1861 = vpop.f32.mrb[0].mxu0
    %v1862 = vadd.f32 0.0, %v1861
    %v1863 = vpop.f32.mrb[0].mxu0
    %1864 = vmatprep.mubr.f32.mxu0 0.0
    %v1865 = vand.u32 %v1728, 4294901760
    %v1866 = vsub.f32 %v1728, %v1865
    %v1867 = vand.u32 %v1866, 4294901760
    %v1868 = vsub.f32 %v1866, %v1867
    %v1869 = vand.u32 %v1868, 4294901760
    %1870 = vmatmul.mubr.f32.gmra.mrb[0].mxu0 %v1869
    %v1871 = vpop.f32.mrb[0].mxu0
    %v1872 = vadd.f32 0.0, %v1871
    %v1873 = vpop.f32.mrb[0].mxu0
    %1874 = vmatprep.mubr.f32.mxu0 0.0
    %v1875 = vand.u32 %v1731, 4294901760
    %v1876 = vsub.f32 %v1731, %v1875
    %v1877 = vand.u32 %v1876, 4294901760
    %v1878 = vsub.f32 %v1876, %v1877
    %v1879 = vand.u32 %v1878, 4294901760
    %1880 = vmatmul.mubr.f32.gmra.mrb[0].mxu0 %v1879
    %v1881 = vpop.f32.mrb[0].mxu0
    %v1882 = vadd.f32 0.0, %v1881
    %v1883 = vpop.f32.mrb[0].mxu0
    %1884 = vmatprep.mubr.f32.mxu0 0.0
    %v1885 = vand.u32 %v1734, 4294901760
    %v1886 = vsub.f32 %v1734, %v1885
    %v1887 = vand.u32 %v1886, 4294901760
    %v1888 = vsub.f32 %v1886, %v1887
    %v1889 = vand.u32 %v1888, 4294901760
    %1890 = vmatmul.mubr.f32.gmra.mrb[0].mxu0 %v1889
    %v1891 = vpop.f32.mrb[0].mxu0
    %v1892 = vadd.f32 0.0, %v1891
    %v1893 = vpop.f32.mrb[0].mxu0
    %1894 = vmatprep.mubr.f32.mxu0 0.0
    %v1895 = vand.u32 %v1737, 4294901760
    %v1896 = vsub.f32 %v1737, %v1895
    %v1897 = vand.u32 %v1896, 4294901760
    %v1898 = vsub.f32 %v1896, %v1897
    %v1899 = vand.u32 %v1898, 4294901760
    %1900 = vmatmul.mubr.f32.gmra.mrb[0].mxu0 %v1899
    %v1901 = vpop.f32.mrb[0].mxu0
    %v1902 = vadd.f32 0.0, %v1901
    %v1903 = vpop.f32.mrb[0].mxu0
    %1904 = vmatprep.mubr.f32.mxu0 0.0
    %v1905 = vand.u32 %v1740, 4294901760
    %v1906 = vsub.f32 %v1740, %v1905
    %v1907 = vand.u32 %v1906, 4294901760
    %v1908 = vsub.f32 %v1906, %v1907
    %v1909 = vand.u32 %v1908, 4294901760
    %1910 = vmatmul.mubr.f32.gmra.mrb[0].mxu0 %v1909
    %v1911 = vpop.f32.mrb[0].mxu0
    %v1912 = vadd.f32 0.0, %v1911
    %v1913 = vpop.f32.mrb[0].mxu0
    %1914 = vdwg.mxu0
    %1915 = vmatprep.subr.mxu0 0.0
    %v1916 = vand.u32 %v37, 4294901760
    %v1917 = vsub.f32 %v37, %v1916
    %v1918 = vand.u32 %v1917, 4294901760
    %v1919 = vsub.f32 %v1917, %v1918
    %v1920 = vand.u32 %v1919, 4294901760
    %1921 = vmatpush1.msra.mxu0 %v1920
    %1922 = vmatprep.subr.mxu0 0.0
    %v1923 = vand.u32 %v38, 4294901760
    %v1924 = vsub.f32 %v38, %v1923
    %v1925 = vand.u32 %v1924, 4294901760
    %v1926 = vsub.f32 %v1924, %v1925
    %v1927 = vand.u32 %v1926, 4294901760
    %1928 = vmatpush1.msra.mxu0 %v1927
    %1929 = vmatprep.subr.mxu0 0.0
    %v1930 = vand.u32 %v39, 4294901760
    %v1931 = vsub.f32 %v39, %v1930
    %v1932 = vand.u32 %v1931, 4294901760
    %v1933 = vsub.f32 %v1931, %v1932
    %v1934 = vand.u32 %v1933, 4294901760
    %1935 = vmatpush1.msra.mxu0 %v1934
    %1936 = vmatprep.subr.mxu0 0.0
    %v1937 = vand.u32 %v40, 4294901760
    %v1938 = vsub.f32 %v40, %v1937
    %v1939 = vand.u32 %v1938, 4294901760
    %v1940 = vsub.f32 %v1938, %v1939
    %v1941 = vand.u32 %v1940, 4294901760
    %1942 = vmatpush1.msra.mxu0 %v1941
    %1943 = vmatprep.subr.mxu0 0.0
    %v1944 = vand.u32 %v41, 4294901760
    %v1945 = vsub.f32 %v41, %v1944
    %v1946 = vand.u32 %v1945, 4294901760
    %v1947 = vsub.f32 %v1945, %v1946
    %v1948 = vand.u32 %v1947, 4294901760
    %1949 = vmatpush1.msra.mxu0 %v1948
    %1950 = vmatprep.subr.mxu0 0.0
    %v1951 = vand.u32 %v42, 4294901760
    %v1952 = vsub.f32 %v42, %v1951
    %v1953 = vand.u32 %v1952, 4294901760
    %v1954 = vsub.f32 %v1952, %v1953
    %v1955 = vand.u32 %v1954, 4294901760
    %1956 = vmatpush1.msra.mxu0 %v1955
    %1957 = vmatprep.subr.mxu0 0.0
    %v1958 = vand.u32 %v43, 4294901760
    %v1959 = vsub.f32 %v43, %v1958
    %v1960 = vand.u32 %v1959, 4294901760
    %v1961 = vsub.f32 %v1959, %v1960
    %v1962 = vand.u32 %v1961, 4294901760
    %1963 = vmatpush1.msra.mxu0 %v1962
    %1964 = vmatprep.subr.mxu0 0.0
    %v1965 = vand.u32 %v44, 4294901760
    %v1966 = vsub.f32 %v44, %v1965
    %v1967 = vand.u32 %v1966, 4294901760
    %v1968 = vsub.f32 %v1966, %v1967
    %v1969 = vand.u32 %v1968, 4294901760
    %1970 = vmatpush1.msra.mxu0 %v1969
    %1971 = vmatprep.subr.mxu0 0.0
    %1972 = vmatpush1.msra.mxu0 0.0
    %1973 = vmatprep.subr.mxu0 0.0
    %1974 = vmatpush1.msra.mxu0 0.0
    %1975 = vmatprep.subr.mxu0 0.0
    %1976 = vmatpush1.msra.mxu0 0.0
    %1977 = vmatprep.subr.mxu0 0.0
    %1978 = vmatpush1.msra.mxu0 0.0
    %1979 = vmatprep.subr.mxu0 0.0
    %1980 = vmatpush1.msra.mxu0 0.0
    %1981 = vmatprep.subr.mxu0 0.0
    %1982 = vmatpush1.msra.mxu0 0.0
    %1983 = vmatprep.subr.mxu0 0.0
    %1984 = vmatpush1.msra.mxu0 0.0
    %1985 = vmatprep.subr.mxu0 0.0
    %1986 = vmatpush1.msra.mxu0 0.0
    %1987 = vmatprep.subr.mxu0 0.0
    %1988 = vmatpush1.msra.mxu0 0.0
    %1989 = vmatprep.subr.mxu0 0.0
    %1990 = vmatpush1.msra.mxu0 0.0
    %1991 = vmatprep.subr.mxu0 0.0
    %1992 = vmatpush1.msra.mxu0 0.0
    %1993 = vmatprep.subr.mxu0 0.0
    %1994 = vmatpush1.msra.mxu0 0.0
    %1995 = vmatprep.subr.mxu0 0.0
    %1996 = vmatpush1.msra.mxu0 0.0
    %1997 = vmatprep.subr.mxu0 0.0
    %1998 = vmatpush1.msra.mxu0 0.0
    %1999 = vmatprep.subr.mxu0 0.0
    %2000 = vmatpush1.msra.mxu0 0.0
    %2001 = vmatprep.subr.mxu0 0.0
    %2002 = vmatpush1.msra.mxu0 0.0
    %2003 = vmatprep.subr.mxu0 0.0
    %2004 = vmatpush1.msra.mxu0 0.0
    %2005 = vmatprep.subr.mxu0 0.0
    %2006 = vmatpush1.msra.mxu0 0.0
    %2007 = vmatprep.subr.mxu0 0.0
    %2008 = vmatpush1.msra.mxu0 0.0
    %2009 = vmatprep.subr.mxu0 0.0
    %2010 = vmatpush1.msra.mxu0 0.0
    %2011 = vmatprep.subr.mxu0 0.0
    %2012 = vmatpush1.msra.mxu0 0.0
    %2013 = vmatprep.subr.mxu0 0.0
    %2014 = vmatpush1.msra.mxu0 0.0
    %2015 = vmatprep.subr.mxu0 0.0
    %2016 = vmatpush1.msra.mxu0 0.0
    %2017 = vmatprep.subr.mxu0 0.0
    %2018 = vmatpush1.msra.mxu0 0.0
    %2019 = vmatprep.mubr.f32.mxu0 0.0
    %v2020 = vand.u32 %v1713, 4294901760
    %2021 = vmatmul.mubr.f32.gmra.mrb[0].mxu0 %v2020
    %v2022 = vpop.f32.mrb[0].mxu0
    %v2023 = vadd.f32 %v1822, %v2022
    %v2024 = vpop.f32.mrb[0].mxu0
    %2025 = vmatprep.mubr.f32.mxu0 0.0
    %v2026 = vand.u32 %v1716, 4294901760
    %2027 = vmatmul.mubr.f32.gmra.mrb[0].mxu0 %v2026
    %v2028 = vpop.f32.mrb[0].mxu0
    %v2029 = vadd.f32 %v1832, %v2028
    %v2030 = vpop.f32.mrb[0].mxu0
    %2031 = vmatprep.mubr.f32.mxu0 0.0
    %v2032 = vand.u32 %v1719, 4294901760
    %2033 = vmatmul.mubr.f32.gmra.mrb[0].mxu0 %v2032
    %v2034 = vpop.f32.mrb[0].mxu0
    %v2035 = vadd.f32 %v1842, %v2034
    %v2036 = vpop.f32.mrb[0].mxu0
    %2037 = vmatprep.mubr.f32.mxu0 0.0
    %v2038 = vand.u32 %v1722, 4294901760
    %2039 = vmatmul.mubr.f32.gmra.mrb[0].mxu0 %v2038
    %v2040 = vpop.f32.mrb[0].mxu0
    %v2041 = vadd.f32 %v1852, %v2040
    %v2042 = vpop.f32.mrb[0].mxu0
    %2043 = vmatprep.mubr.f32.mxu0 0.0
    %v2044 = vand.u32 %v1725, 4294901760
    %2045 = vmatmul.mubr.f32.gmra.mrb[0].mxu0 %v2044
    %v2046 = vpop.f32.mrb[0].mxu0
    %v2047 = vadd.f32 %v1862, %v2046
    %v2048 = vpop.f32.mrb[0].mxu0
    %2049 = vmatprep.mubr.f32.mxu0 0.0
    %v2050 = vand.u32 %v1728, 4294901760
    %2051 = vmatmul.mubr.f32.gmra.mrb[0].mxu0 %v2050
    %v2052 = vpop.f32.mrb[0].mxu0
    %v2053 = vadd.f32 %v1872, %v2052
    %v2054 = vpop.f32.mrb[0].mxu0
    %2055 = vmatprep.mubr.f32.mxu0 0.0
    %v2056 = vand.u32 %v1731, 4294901760
    %2057 = vmatmul.mubr.f32.gmra.mrb[0].mxu0 %v2056
    %v2058 = vpop.f32.mrb[0].mxu0
    %v2059 = vadd.f32 %v1882, %v2058
    %v2060 = vpop.f32.mrb[0].mxu0
    %2061 = vmatprep.mubr.f32.mxu0 0.0
    %v2062 = vand.u32 %v1734, 4294901760
    %2063 = vmatmul.mubr.f32.gmra.mrb[0].mxu0 %v2062
    %v2064 = vpop.f32.mrb[0].mxu0
    %v2065 = vadd.f32 %v1892, %v2064
    %v2066 = vpop.f32.mrb[0].mxu0
    %2067 = vmatprep.mubr.f32.mxu0 0.0
    %v2068 = vand.u32 %v1737, 4294901760
    %2069 = vmatmul.mubr.f32.gmra.mrb[0].mxu0 %v2068
    %v2070 = vpop.f32.mrb[0].mxu0
    %v2071 = vadd.f32 %v1902, %v2070
    %v2072 = vpop.f32.mrb[0].mxu0
    %2073 = vmatprep.mubr.f32.mxu0 0.0
    %v2074 = vand.u32 %v1740, 4294901760
    %2075 = vmatmul.mubr.f32.gmra.mrb[0].mxu0 %v2074
    %v2076 = vpop.f32.mrb[0].mxu0
    %v2077 = vadd.f32 %v1912, %v2076
    %v2078 = vpop.f32.mrb[0].mxu0
    %2079 = vdwg.mxu0
    %2080 = vmatprep.subr.mxu0 0.0
    %v2081 = vand.u32 %v37, 4294901760
    %v2082 = vsub.f32 %v37, %v2081
    %2083 = vmatpush1.msra.mxu0 %v2082
    %2084 = vmatprep.subr.mxu0 0.0
    %v2085 = vand.u32 %v38, 4294901760
    %v2086 = vsub.f32 %v38, %v2085
    %2087 = vmatpush1.msra.mxu0 %v2086
    %2088 = vmatprep.subr.mxu0 0.0
    %v2089 = vand.u32 %v39, 4294901760
    %v2090 = vsub.f32 %v39, %v2089
    %2091 = vmatpush1.msra.mxu0 %v2090
    %2092 = vmatprep.subr.mxu0 0.0
    %v2093 = vand.u32 %v40, 4294901760
    %v2094 = vsub.f32 %v40, %v2093
    %2095 = vmatpush1.msra.mxu0 %v2094
    %2096 = vmatprep.subr.mxu0 0.0
    %v2097 = vand.u32 %v41, 4294901760
    %v2098 = vsub.f32 %v41, %v2097
    %2099 = vmatpush1.msra.mxu0 %v2098
    %2100 = vmatprep.subr.mxu0 0.0
    %v2101 = vand.u32 %v42, 4294901760
    %v2102 = vsub.f32 %v42, %v2101
    %2103 = vmatpush1.msra.mxu0 %v2102
    %2104 = vmatprep.subr.mxu0 0.0
    %v2105 = vand.u32 %v43, 4294901760
    %v2106 = vsub.f32 %v43, %v2105
    %2107 = vmatpush1.msra.mxu0 %v2106
    %2108 = vmatprep.subr.mxu0 0.0
    %v2109 = vand.u32 %v44, 4294901760
    %v2110 = vsub.f32 %v44, %v2109
    %2111 = vmatpush1.msra.mxu0 %v2110
    %2112 = vmatprep.subr.mxu0 0.0
    %2113 = vmatpush1.msra.mxu0 0.0
    %2114 = vmatprep.subr.mxu0 0.0
    %2115 = vmatpush1.msra.mxu0 0.0
    %2116 = vmatprep.subr.mxu0 0.0
    %2117 = vmatpush1.msra.mxu0 0.0
    %2118 = vmatprep.subr.mxu0 0.0
    %2119 = vmatpush1.msra.mxu0 0.0
    %2120 = vmatprep.subr.mxu0 0.0
    %2121 = vmatpush1.msra.mxu0 0.0
    %2122 = vmatprep.subr.mxu0 0.0
    %2123 = vmatpush1.msra.mxu0 0.0
    %2124 = vmatprep.subr.mxu0 0.0
    %2125 = vmatpush1.msra.mxu0 0.0
    %2126 = vmatprep.subr.mxu0 0.0
    %2127 = vmatpush1.msra.mxu0 0.0
    %2128 = vmatprep.subr.mxu0 0.0
    %2129 = vmatpush1.msra.mxu0 0.0
    %2130 = vmatprep.subr.mxu0 0.0
    %2131 = vmatpush1.msra.mxu0 0.0
    %2132 = vmatprep.subr.mxu0 0.0
    %2133 = vmatpush1.msra.mxu0 0.0
    %2134 = vmatprep.subr.mxu0 0.0
    %2135 = vmatpush1.msra.mxu0 0.0
    %2136 = vmatprep.subr.mxu0 0.0
    %2137 = vmatpush1.msra.mxu0 0.0
    %2138 = vmatprep.subr.mxu0 0.0
    %2139 = vmatpush1.msra.mxu0 0.0
    %2140 = vmatprep.subr.mxu0 0.0
    %2141 = vmatpush1.msra.mxu0 0.0
    %2142 = vmatprep.subr.mxu0 0.0
    %2143 = vmatpush1.msra.mxu0 0.0
    %2144 = vmatprep.subr.mxu0 0.0
    %2145 = vmatpush1.msra.mxu0 0.0
    %2146 = vmatprep.subr.mxu0 0.0
    %2147 = vmatpush1.msra.mxu0 0.0
    %2148 = vmatprep.subr.mxu0 0.0
    %2149 = vmatpush1.msra.mxu0 0.0
    %2150 = vmatprep.subr.mxu0 0.0
    %2151 = vmatpush1.msra.mxu0 0.0
    %2152 = vmatprep.subr.mxu0 0.0
    %2153 = vmatpush1.msra.mxu0 0.0
    %2154 = vmatprep.subr.mxu0 0.0
    %2155 = vmatpush1.msra.mxu0 0.0
    %2156 = vmatprep.subr.mxu0 0.0
    %2157 = vmatpush1.msra.mxu0 0.0
    %2158 = vmatprep.subr.mxu0 0.0
    %2159 = vmatpush1.msra.mxu0 0.0
    %2160 = vmatprep.mubr.f32.mxu0 0.0
    %v2161 = vand.u32 %v1713, 4294901760
    %v2162 = vsub.f32 %v1713, %v2161
    %2163 = vmatmul.mubr.f32.gmra.mrb[0].mxu0 %v2162
    %v2164 = vpop.f32.mrb[0].mxu0
    %v2165 = vadd.f32 %v2023, %v2164
    %v2166 = vpop.f32.mrb[0].mxu0
    %2167 = vmatprep.mubr.f32.mxu0 0.0
    %v2168 = vand.u32 %v1716, 4294901760
    %v2169 = vsub.f32 %v1716, %v2168
    %2170 = vmatmul.mubr.f32.gmra.mrb[0].mxu0 %v2169
    %v2171 = vpop.f32.mrb[0].mxu0
    %v2172 = vadd.f32 %v2029, %v2171
    %v2173 = vpop.f32.mrb[0].mxu0
    %2174 = vmatprep.mubr.f32.mxu0 0.0
    %v2175 = vand.u32 %v1719, 4294901760
    %v2176 = vsub.f32 %v1719, %v2175
    %2177 = vmatmul.mubr.f32.gmra.mrb[0].mxu0 %v2176
    %v2178 = vpop.f32.mrb[0].mxu0
    %v2179 = vadd.f32 %v2035, %v2178
    %v2180 = vpop.f32.mrb[0].mxu0
    %2181 = vmatprep.mubr.f32.mxu0 0.0
    %v2182 = vand.u32 %v1722, 4294901760
    %v2183 = vsub.f32 %v1722, %v2182
    %2184 = vmatmul.mubr.f32.gmra.mrb[0].mxu0 %v2183
    %v2185 = vpop.f32.mrb[0].mxu0
    %v2186 = vadd.f32 %v2041, %v2185
    %v2187 = vpop.f32.mrb[0].mxu0
    %2188 = vmatprep.mubr.f32.mxu0 0.0
    %v2189 = vand.u32 %v1725, 4294901760
    %v2190 = vsub.f32 %v1725, %v2189
    %2191 = vmatmul.mubr.f32.gmra.mrb[0].mxu0 %v2190
    %v2192 = vpop.f32.mrb[0].mxu0
    %v2193 = vadd.f32 %v2047, %v2192
    %v2194 = vpop.f32.mrb[0].mxu0
    %2195 = vmatprep.mubr.f32.mxu0 0.0
    %v2196 = vand.u32 %v1728, 4294901760
    %v2197 = vsub.f32 %v1728, %v2196
    %2198 = vmatmul.mubr.f32.gmra.mrb[0].mxu0 %v2197
    %v2199 = vpop.f32.mrb[0].mxu0
    %v2200 = vadd.f32 %v2053, %v2199
    %v2201 = vpop.f32.mrb[0].mxu0
    %2202 = vmatprep.mubr.f32.mxu0 0.0
    %v2203 = vand.u32 %v1731, 4294901760
    %v2204 = vsub.f32 %v1731, %v2203
    %2205 = vmatmul.mubr.f32.gmra.mrb[0].mxu0 %v2204
    %v2206 = vpop.f32.mrb[0].mxu0
    %v2207 = vadd.f32 %v2059, %v2206
    %v2208 = vpop.f32.mrb[0].mxu0
    %2209 = vmatprep.mubr.f32.mxu0 0.0
    %v2210 = vand.u32 %v1734, 4294901760
    %v2211 = vsub.f32 %v1734, %v2210
    %2212 = vmatmul.mubr.f32.gmra.mrb[0].mxu0 %v2211
    %v2213 = vpop.f32.mrb[0].mxu0
    %v2214 = vadd.f32 %v2065, %v2213
    %v2215 = vpop.f32.mrb[0].mxu0
    %2216 = vmatprep.mubr.f32.mxu0 0.0
    %v2217 = vand.u32 %v1737, 4294901760
    %v2218 = vsub.f32 %v1737, %v2217
    %2219 = vmatmul.mubr.f32.gmra.mrb[0].mxu0 %v2218
    %v2220 = vpop.f32.mrb[0].mxu0
    %v2221 = vadd.f32 %v2071, %v2220
    %v2222 = vpop.f32.mrb[0].mxu0
    %2223 = vmatprep.mubr.f32.mxu0 0.0
    %v2224 = vand.u32 %v1740, 4294901760
    %v2225 = vsub.f32 %v1740, %v2224
    %2226 = vmatmul.mubr.f32.gmra.mrb[0].mxu0 %v2225
    %v2227 = vpop.f32.mrb[0].mxu0
    %v2228 = vadd.f32 %v2077, %v2227
    %v2229 = vpop.f32.mrb[0].mxu0
    %2230 = vdwg.mxu0
    %2231 = vmatprep.subr.mxu0 0.0
    %v2232 = vand.u32 %v37, 4294901760
    %2233 = vmatpush1.msra.mxu0 %v2232
    %2234 = vmatprep.subr.mxu0 0.0
    %v2235 = vand.u32 %v38, 4294901760
    %2236 = vmatpush1.msra.mxu0 %v2235
    %2237 = vmatprep.subr.mxu0 0.0
    %v2238 = vand.u32 %v39, 4294901760
    %2239 = vmatpush1.msra.mxu0 %v2238
    %2240 = vmatprep.subr.mxu0 0.0
    %v2241 = vand.u32 %v40, 4294901760
    %2242 = vmatpush1.msra.mxu0 %v2241
    %2243 = vmatprep.subr.mxu0 0.0
    %v2244 = vand.u32 %v41, 4294901760
    %2245 = vmatpush1.msra.mxu0 %v2244
    %2246 = vmatprep.subr.mxu0 0.0
    %v2247 = vand.u32 %v42, 4294901760
    %2248 = vmatpush1.msra.mxu0 %v2247
    %2249 = vmatprep.subr.mxu0 0.0
    %v2250 = vand.u32 %v43, 4294901760
    %2251 = vmatpush1.msra.mxu0 %v2250
    %2252 = vmatprep.subr.mxu0 0.0
    %v2253 = vand.u32 %v44, 4294901760
    %2254 = vmatpush1.msra.mxu0 %v2253
    %2255 = vmatprep.subr.mxu0 0.0
    %2256 = vmatpush1.msra.mxu0 0.0
    %2257 = vmatprep.subr.mxu0 0.0
    %2258 = vmatpush1.msra.mxu0 0.0
    %2259 = vmatprep.subr.mxu0 0.0
    %2260 = vmatpush1.msra.mxu0 0.0
    %2261 = vmatprep.subr.mxu0 0.0
    %2262 = vmatpush1.msra.mxu0 0.0
    %2263 = vmatprep.subr.mxu0 0.0
    %2264 = vmatpush1.msra.mxu0 0.0
    %2265 = vmatprep.subr.mxu0 0.0
    %2266 = vmatpush1.msra.mxu0 0.0
    %2267 = vmatprep.subr.mxu0 0.0
    %2268 = vmatpush1.msra.mxu0 0.0
    %2269 = vmatprep.subr.mxu0 0.0
    %2270 = vmatpush1.msra.mxu0 0.0
    %2271 = vmatprep.subr.mxu0 0.0
    %2272 = vmatpush1.msra.mxu0 0.0
    %2273 = vmatprep.subr.mxu0 0.0
    %2274 = vmatpush1.msra.mxu0 0.0
    %2275 = vmatprep.subr.mxu0 0.0
    %2276 = vmatpush1.msra.mxu0 0.0
    %2277 = vmatprep.subr.mxu0 0.0
    %2278 = vmatpush1.msra.mxu0 0.0
    %2279 = vmatprep.subr.mxu0 0.0
    %2280 = vmatpush1.msra.mxu0 0.0
    %2281 = vmatprep.subr.mxu0 0.0
    %2282 = vmatpush1.msra.mxu0 0.0
    %2283 = vmatprep.subr.mxu0 0.0
    %2284 = vmatpush1.msra.mxu0 0.0
    %2285 = vmatprep.subr.mxu0 0.0
    %2286 = vmatpush1.msra.mxu0 0.0
    %2287 = vmatprep.subr.mxu0 0.0
    %2288 = vmatpush1.msra.mxu0 0.0
    %2289 = vmatprep.subr.mxu0 0.0
    %2290 = vmatpush1.msra.mxu0 0.0
    %2291 = vmatprep.subr.mxu0 0.0
    %2292 = vmatpush1.msra.mxu0 0.0
    %2293 = vmatprep.subr.mxu0 0.0
    %2294 = vmatpush1.msra.mxu0 0.0
    %2295 = vmatprep.subr.mxu0 0.0
    %2296 = vmatpush1.msra.mxu0 0.0
    %2297 = vmatprep.subr.mxu0 0.0
    %2298 = vmatpush1.msra.mxu0 0.0
    %2299 = vmatprep.subr.mxu0 0.0
    %2300 = vmatpush1.msra.mxu0 0.0
    %2301 = vmatprep.subr.mxu0 0.0
    %2302 = vmatpush1.msra.mxu0 0.0
    %2303 = vmatprep.mubr.f32.mxu0 0.0
    %v2304 = vand.u32 %v1713, 4294901760
    %v2305 = vsub.f32 %v1713, %v2304
    %v2306 = vand.u32 %v2305, 4294901760
    %2307 = vmatmul.mubr.f32.gmra.mrb[0].mxu0 %v2306
    %v2308 = vpop.f32.mrb[0].mxu0
    %v2309 = vadd.f32 %v2165, %v2308
    %v2310 = vpop.f32.mrb[0].mxu0
    %2311 = vmatprep.mubr.f32.mxu0 0.0
    %v2312 = vand.u32 %v1716, 4294901760
    %v2313 = vsub.f32 %v1716, %v2312
    %v2314 = vand.u32 %v2313, 4294901760
    %2315 = vmatmul.mubr.f32.gmra.mrb[0].mxu0 %v2314
    %v2316 = vpop.f32.mrb[0].mxu0
    %v2317 = vadd.f32 %v2172, %v2316
    %v2318 = vpop.f32.mrb[0].mxu0
    %2319 = vmatprep.mubr.f32.mxu0 0.0
    %v2320 = vand.u32 %v1719, 4294901760
    %v2321 = vsub.f32 %v1719, %v2320
    %v2322 = vand.u32 %v2321, 4294901760
    %2323 = vmatmul.mubr.f32.gmra.mrb[0].mxu0 %v2322
    %v2324 = vpop.f32.mrb[0].mxu0
    %v2325 = vadd.f32 %v2179, %v2324
    %v2326 = vpop.f32.mrb[0].mxu0
    %2327 = vmatprep.mubr.f32.mxu0 0.0
    %v2328 = vand.u32 %v1722, 4294901760
    %v2329 = vsub.f32 %v1722, %v2328
    %v2330 = vand.u32 %v2329, 4294901760
    %2331 = vmatmul.mubr.f32.gmra.mrb[0].mxu0 %v2330
    %v2332 = vpop.f32.mrb[0].mxu0
    %v2333 = vadd.f32 %v2186, %v2332
    %v2334 = vpop.f32.mrb[0].mxu0
    %2335 = vmatprep.mubr.f32.mxu0 0.0
    %v2336 = vand.u32 %v1725, 4294901760
    %v2337 = vsub.f32 %v1725, %v2336
    %v2338 = vand.u32 %v2337, 4294901760
    %2339 = vmatmul.mubr.f32.gmra.mrb[0].mxu0 %v2338
    %v2340 = vpop.f32.mrb[0].mxu0
    %v2341 = vadd.f32 %v2193, %v2340
    %v2342 = vpop.f32.mrb[0].mxu0
    %2343 = vmatprep.mubr.f32.mxu0 0.0
    %v2344 = vand.u32 %v1728, 4294901760
    %v2345 = vsub.f32 %v1728, %v2344
    %v2346 = vand.u32 %v2345, 4294901760
    %2347 = vmatmul.mubr.f32.gmra.mrb[0].mxu0 %v2346
    %v2348 = vpop.f32.mrb[0].mxu0
    %v2349 = vadd.f32 %v2200, %v2348
    %v2350 = vpop.f32.mrb[0].mxu0
    %2351 = vmatprep.mubr.f32.mxu0 0.0
    %v2352 = vand.u32 %v1731, 4294901760
    %v2353 = vsub.f32 %v1731, %v2352
    %v2354 = vand.u32 %v2353, 4294901760
    %2355 = vmatmul.mubr.f32.gmra.mrb[0].mxu0 %v2354
    %v2356 = vpop.f32.mrb[0].mxu0
    %v2357 = vadd.f32 %v2207, %v2356
    %v2358 = vpop.f32.mrb[0].mxu0
    %2359 = vmatprep.mubr.f32.mxu0 0.0
    %v2360 = vand.u32 %v1734, 4294901760
    %v2361 = vsub.f32 %v1734, %v2360
    %v2362 = vand.u32 %v2361, 4294901760
    %2363 = vmatmul.mubr.f32.gmra.mrb[0].mxu0 %v2362
    %v2364 = vpop.f32.mrb[0].mxu0
    %v2365 = vadd.f32 %v2214, %v2364
    %v2366 = vpop.f32.mrb[0].mxu0
    %2367 = vmatprep.mubr.f32.mxu0 0.0
    %v2368 = vand.u32 %v1737, 4294901760
    %v2369 = vsub.f32 %v1737, %v2368
    %v2370 = vand.u32 %v2369, 4294901760
    %2371 = vmatmul.mubr.f32.gmra.mrb[0].mxu0 %v2370
    %v2372 = vpop.f32.mrb[0].mxu0
    %v2373 = vadd.f32 %v2221, %v2372
    %v2374 = vpop.f32.mrb[0].mxu0
    %2375 = vmatprep.mubr.f32.mxu0 0.0
    %v2376 = vand.u32 %v1740, 4294901760
    %v2377 = vsub.f32 %v1740, %v2376
    %v2378 = vand.u32 %v2377, 4294901760
    %2379 = vmatmul.mubr.f32.gmra.mrb[0].mxu0 %v2378
    %v2380 = vpop.f32.mrb[0].mxu0
    %v2381 = vadd.f32 %v2228, %v2380
    %v2382 = vpop.f32.mrb[0].mxu0
    %2383 = vdwg.mxu0
    %2384 = vmatprep.subr.mxu0 0.0
    %v2385 = vand.u32 %v37, 4294901760
    %v2386 = vsub.f32 %v37, %v2385
    %v2387 = vand.u32 %v2386, 4294901760
    %2388 = vmatpush1.msra.mxu0 %v2387
    %2389 = vmatprep.subr.mxu0 0.0
    %v2390 = vand.u32 %v38, 4294901760
    %v2391 = vsub.f32 %v38, %v2390
    %v2392 = vand.u32 %v2391, 4294901760
    %2393 = vmatpush1.msra.mxu0 %v2392
    %2394 = vmatprep.subr.mxu0 0.0
    %v2395 = vand.u32 %v39, 4294901760
    %v2396 = vsub.f32 %v39, %v2395
    %v2397 = vand.u32 %v2396, 4294901760
    %2398 = vmatpush1.msra.mxu0 %v2397
    %2399 = vmatprep.subr.mxu0 0.0
    %v2400 = vand.u32 %v40, 4294901760
    %v2401 = vsub.f32 %v40, %v2400
    %v2402 = vand.u32 %v2401, 4294901760
    %2403 = vmatpush1.msra.mxu0 %v2402
    %2404 = vmatprep.subr.mxu0 0.0
    %v2405 = vand.u32 %v41, 4294901760
    %v2406 = vsub.f32 %v41, %v2405
    %v2407 = vand.u32 %v2406, 4294901760
    %2408 = vmatpush1.msra.mxu0 %v2407
    %2409 = vmatprep.subr.mxu0 0.0
    %v2410 = vand.u32 %v42, 4294901760
    %v2411 = vsub.f32 %v42, %v2410
    %v2412 = vand.u32 %v2411, 4294901760
    %2413 = vmatpush1.msra.mxu0 %v2412
    %2414 = vmatprep.subr.mxu0 0.0
    %v2415 = vand.u32 %v43, 4294901760
    %v2416 = vsub.f32 %v43, %v2415
    %v2417 = vand.u32 %v2416, 4294901760
    %2418 = vmatpush1.msra.mxu0 %v2417
    %2419 = vmatprep.subr.mxu0 0.0
    %v2420 = vand.u32 %v44, 4294901760
    %v2421 = vsub.f32 %v44, %v2420
    %v2422 = vand.u32 %v2421, 4294901760
    %2423 = vmatpush1.msra.mxu0 %v2422
    %2424 = vmatprep.subr.mxu0 0.0
    %2425 = vmatpush1.msra.mxu0 0.0
    %2426 = vmatprep.subr.mxu0 0.0
    %2427 = vmatpush1.msra.mxu0 0.0
    %2428 = vmatprep.subr.mxu0 0.0
    %2429 = vmatpush1.msra.mxu0 0.0
    %2430 = vmatprep.subr.mxu0 0.0
    %2431 = vmatpush1.msra.mxu0 0.0
    %2432 = vmatprep.subr.mxu0 0.0
    %2433 = vmatpush1.msra.mxu0 0.0
    %2434 = vmatprep.subr.mxu0 0.0
    %2435 = vmatpush1.msra.mxu0 0.0
    %2436 = vmatprep.subr.mxu0 0.0
    %2437 = vmatpush1.msra.mxu0 0.0
    %2438 = vmatprep.subr.mxu0 0.0
    %2439 = vmatpush1.msra.mxu0 0.0
    %2440 = vmatprep.subr.mxu0 0.0
    %2441 = vmatpush1.msra.mxu0 0.0
    %2442 = vmatprep.subr.mxu0 0.0
    %2443 = vmatpush1.msra.mxu0 0.0
    %2444 = vmatprep.subr.mxu0 0.0
    %2445 = vmatpush1.msra.mxu0 0.0
    %2446 = vmatprep.subr.mxu0 0.0
    %2447 = vmatpush1.msra.mxu0 0.0
    %2448 = vmatprep.subr.mxu0 0.0
    %2449 = vmatpush1.msra.mxu0 0.0
    %2450 = vmatprep.subr.mxu0 0.0
    %2451 = vmatpush1.msra.mxu0 0.0
    %2452 = vmatprep.subr.mxu0 0.0
    %2453 = vmatpush1.msra.mxu0 0.0
    %2454 = vmatprep.subr.mxu0 0.0
    %2455 = vmatpush1.msra.mxu0 0.0
    %2456 = vmatprep.subr.mxu0 0.0
    %2457 = vmatpush1.msra.mxu0 0.0
    %2458 = vmatprep.subr.mxu0 0.0
    %2459 = vmatpush1.msra.mxu0 0.0
    %2460 = vmatprep.subr.mxu0 0.0
    %2461 = vmatpush1.msra.mxu0 0.0
    %2462 = vmatprep.subr.mxu0 0.0
    %2463 = vmatpush1.msra.mxu0 0.0
    %2464 = vmatprep.subr.mxu0 0.0
    %2465 = vmatpush1.msra.mxu0 0.0
    %2466 = vmatprep.subr.mxu0 0.0
    %2467 = vmatpush1.msra.mxu0 0.0
    %2468 = vmatprep.subr.mxu0 0.0
    %2469 = vmatpush1.msra.mxu0 0.0
    %2470 = vmatprep.subr.mxu0 0.0
    %2471 = vmatpush1.msra.mxu0 0.0
    %2472 = vmatprep.mubr.f32.mxu0 0.0
    %v2473 = vand.u32 %v1713, 4294901760
    %2474 = vmatmul.mubr.f32.gmra.mrb[0].mxu0 %v2473
    %v2475 = vpop.f32.mrb[0].mxu0
    %v2476 = vadd.f32 %v2309, %v2475
    %v2477 = vpop.f32.mrb[0].mxu0
    %2478 = vmatprep.mubr.f32.mxu0 0.0
    %v2479 = vand.u32 %v1716, 4294901760
    %2480 = vmatmul.mubr.f32.gmra.mrb[0].mxu0 %v2479
    %v2481 = vpop.f32.mrb[0].mxu0
    %v2482 = vadd.f32 %v2317, %v2481
    %v2483 = vpop.f32.mrb[0].mxu0
    %2484 = vmatprep.mubr.f32.mxu0 0.0
    %v2485 = vand.u32 %v1719, 4294901760
    %2486 = vmatmul.mubr.f32.gmra.mrb[0].mxu0 %v2485
    %v2487 = vpop.f32.mrb[0].mxu0
    %v2488 = vadd.f32 %v2325, %v2487
    %v2489 = vpop.f32.mrb[0].mxu0
    %2490 = vmatprep.mubr.f32.mxu0 0.0
    %v2491 = vand.u32 %v1722, 4294901760
    %2492 = vmatmul.mubr.f32.gmra.mrb[0].mxu0 %v2491
    %v2493 = vpop.f32.mrb[0].mxu0
    %v2494 = vadd.f32 %v2333, %v2493
    %v2495 = vpop.f32.mrb[0].mxu0
    %2496 = vmatprep.mubr.f32.mxu0 0.0
    %v2497 = vand.u32 %v1725, 4294901760
    %2498 = vmatmul.mubr.f32.gmra.mrb[0].mxu0 %v2497
    %v2499 = vpop.f32.mrb[0].mxu0
    %v2500 = vadd.f32 %v2341, %v2499
    %v2501 = vpop.f32.mrb[0].mxu0
    %2502 = vmatprep.mubr.f32.mxu0 0.0
    %v2503 = vand.u32 %v1728, 4294901760
    %2504 = vmatmul.mubr.f32.gmra.mrb[0].mxu0 %v2503
    %v2505 = vpop.f32.mrb[0].mxu0
    %v2506 = vadd.f32 %v2349, %v2505
    %v2507 = vpop.f32.mrb[0].mxu0
    %2508 = vmatprep.mubr.f32.mxu0 0.0
    %v2509 = vand.u32 %v1731, 4294901760
    %2510 = vmatmul.mubr.f32.gmra.mrb[0].mxu0 %v2509
    %v2511 = vpop.f32.mrb[0].mxu0
    %v2512 = vadd.f32 %v2357, %v2511
    %v2513 = vpop.f32.mrb[0].mxu0
    %2514 = vmatprep.mubr.f32.mxu0 0.0
    %v2515 = vand.u32 %v1734, 4294901760
    %2516 = vmatmul.mubr.f32.gmra.mrb[0].mxu0 %v2515
    %v2517 = vpop.f32.mrb[0].mxu0
    %v2518 = vadd.f32 %v2365, %v2517
    %v2519 = vpop.f32.mrb[0].mxu0
    %2520 = vmatprep.mubr.f32.mxu0 0.0
    %v2521 = vand.u32 %v1737, 4294901760
    %2522 = vmatmul.mubr.f32.gmra.mrb[0].mxu0 %v2521
    %v2523 = vpop.f32.mrb[0].mxu0
    %v2524 = vadd.f32 %v2373, %v2523
    %v2525 = vpop.f32.mrb[0].mxu0
    %2526 = vmatprep.mubr.f32.mxu0 0.0
    %v2527 = vand.u32 %v1740, 4294901760
    %2528 = vmatmul.mubr.f32.gmra.mrb[0].mxu0 %v2527
    %v2529 = vpop.f32.mrb[0].mxu0
    %v2530 = vadd.f32 %v2381, %v2529
    %v2531 = vpop.f32.mrb[0].mxu0
    %2532 = vdwg.mxu0
    %2533 = vmatprep.subr.mxu0 0.0
    %v2534 = vand.u32 %v37, 4294901760
    %2535 = vmatpush1.msra.mxu0 %v2534
    %2536 = vmatprep.subr.mxu0 0.0
    %v2537 = vand.u32 %v38, 4294901760
    %2538 = vmatpush1.msra.mxu0 %v2537
    %2539 = vmatprep.subr.mxu0 0.0
    %v2540 = vand.u32 %v39, 4294901760
    %2541 = vmatpush1.msra.mxu0 %v2540
    %2542 = vmatprep.subr.mxu0 0.0
    %v2543 = vand.u32 %v40, 4294901760
    %2544 = vmatpush1.msra.mxu0 %v2543
    %2545 = vmatprep.subr.mxu0 0.0
    %v2546 = vand.u32 %v41, 4294901760
    %2547 = vmatpush1.msra.mxu0 %v2546
    %2548 = vmatprep.subr.mxu0 0.0
    %v2549 = vand.u32 %v42, 4294901760
    %2550 = vmatpush1.msra.mxu0 %v2549
    %2551 = vmatprep.subr.mxu0 0.0
    %v2552 = vand.u32 %v43, 4294901760
    %2553 = vmatpush1.msra.mxu0 %v2552
    %2554 = vmatprep.subr.mxu0 0.0
    %v2555 = vand.u32 %v44, 4294901760
    %2556 = vmatpush1.msra.mxu0 %v2555
    %2557 = vmatprep.subr.mxu0 0.0
    %2558 = vmatpush1.msra.mxu0 0.0
    %2559 = vmatprep.subr.mxu0 0.0
    %2560 = vmatpush1.msra.mxu0 0.0
    %2561 = vmatprep.subr.mxu0 0.0
    %2562 = vmatpush1.msra.mxu0 0.0
    %2563 = vmatprep.subr.mxu0 0.0
    %2564 = vmatpush1.msra.mxu0 0.0
    %2565 = vmatprep.subr.mxu0 0.0
    %2566 = vmatpush1.msra.mxu0 0.0
    %2567 = vmatprep.subr.mxu0 0.0
    %2568 = vmatpush1.msra.mxu0 0.0
    %2569 = vmatprep.subr.mxu0 0.0
    %2570 = vmatpush1.msra.mxu0 0.0
    %2571 = vmatprep.subr.mxu0 0.0
    %2572 = vmatpush1.msra.mxu0 0.0
    %2573 = vmatprep.subr.mxu0 0.0
    %2574 = vmatpush1.msra.mxu0 0.0
    %2575 = vmatprep.subr.mxu0 0.0
    %2576 = vmatpush1.msra.mxu0 0.0
    %2577 = vmatprep.subr.mxu0 0.0
    %2578 = vmatpush1.msra.mxu0 0.0
    %2579 = vmatprep.subr.mxu0 0.0
    %2580 = vmatpush1.msra.mxu0 0.0
    %2581 = vmatprep.subr.mxu0 0.0
    %2582 = vmatpush1.msra.mxu0 0.0
    %2583 = vmatprep.subr.mxu0 0.0
    %2584 = vmatpush1.msra.mxu0 0.0
    %2585 = vmatprep.subr.mxu0 0.0
    %2586 = vmatpush1.msra.mxu0 0.0
    %2587 = vmatprep.subr.mxu0 0.0
    %2588 = vmatpush1.msra.mxu0 0.0
    %2589 = vmatprep.subr.mxu0 0.0
    %2590 = vmatpush1.msra.mxu0 0.0
    %2591 = vmatprep.subr.mxu0 0.0
    %2592 = vmatpush1.msra.mxu0 0.0
    %2593 = vmatprep.subr.mxu0 0.0
    %2594 = vmatpush1.msra.mxu0 0.0
    %2595 = vmatprep.subr.mxu0 0.0
    %2596 = vmatpush1.msra.mxu0 0.0
    %2597 = vmatprep.subr.mxu0 0.0
    %2598 = vmatpush1.msra.mxu0 0.0
    %2599 = vmatprep.subr.mxu0 0.0
    %2600 = vmatpush1.msra.mxu0 0.0
    %2601 = vmatprep.subr.mxu0 0.0
    %2602 = vmatpush1.msra.mxu0 0.0
    %2603 = vmatprep.subr.mxu0 0.0
    %2604 = vmatpush1.msra.mxu0 0.0
    %2605 = vmatprep.mubr.f32.mxu0 0.0
    %v2606 = vand.u32 %v1713, 4294901760
    %2607 = vmatmul.mubr.f32.gmra.mrb[0].mxu0 %v2606
    %v2608 = vpop.f32.mrb[0].mxu0
    %v2609 = vadd.f32 %v2476, %v2608
    %v2610 = vpop.f32.mrb[0].mxu0
    %2611 = vmatprep.mubr.f32.mxu0 0.0
    %v2612 = vand.u32 %v1716, 4294901760
    %2613 = vmatmul.mubr.f32.gmra.mrb[0].mxu0 %v2612
    %v2614 = vpop.f32.mrb[0].mxu0
    %v2615 = vadd.f32 %v2482, %v2614
    %v2616 = vpop.f32.mrb[0].mxu0
    %2617 = vmatprep.mubr.f32.mxu0 0.0
    %v2618 = vand.u32 %v1719, 4294901760
    %2619 = vmatmul.mubr.f32.gmra.mrb[0].mxu0 %v2618
    %v2620 = vpop.f32.mrb[0].mxu0
    %v2621 = vadd.f32 %v2488, %v2620
    %v2622 = vpop.f32.mrb[0].mxu0
    %2623 = vmatprep.mubr.f32.mxu0 0.0
    %v2624 = vand.u32 %v1722, 4294901760
    %2625 = vmatmul.mubr.f32.gmra.mrb[0].mxu0 %v2624
    %v2626 = vpop.f32.mrb[0].mxu0
    %v2627 = vadd.f32 %v2494, %v2626
    %v2628 = vpop.f32.mrb[0].mxu0
    %2629 = vmatprep.mubr.f32.mxu0 0.0
    %v2630 = vand.u32 %v1725, 4294901760
    %2631 = vmatmul.mubr.f32.gmra.mrb[0].mxu0 %v2630
    %v2632 = vpop.f32.mrb[0].mxu0
    %v2633 = vadd.f32 %v2500, %v2632
    %v2634 = vpop.f32.mrb[0].mxu0
    %2635 = vmatprep.mubr.f32.mxu0 0.0
    %v2636 = vand.u32 %v1728, 4294901760
    %2637 = vmatmul.mubr.f32.gmra.mrb[0].mxu0 %v2636
    %v2638 = vpop.f32.mrb[0].mxu0
    %v2639 = vadd.f32 %v2506, %v2638
    %v2640 = vpop.f32.mrb[0].mxu0
    %2641 = vmatprep.mubr.f32.mxu0 0.0
    %v2642 = vand.u32 %v1731, 4294901760
    %2643 = vmatmul.mubr.f32.gmra.mrb[0].mxu0 %v2642
    %v2644 = vpop.f32.mrb[0].mxu0
    %v2645 = vadd.f32 %v2512, %v2644
    %v2646 = vpop.f32.mrb[0].mxu0
    %2647 = vmatprep.mubr.f32.mxu0 0.0
    %v2648 = vand.u32 %v1734, 4294901760
    %2649 = vmatmul.mubr.f32.gmra.mrb[0].mxu0 %v2648
    %v2650 = vpop.f32.mrb[0].mxu0
    %v2651 = vadd.f32 %v2518, %v2650
    %v2652 = vpop.f32.mrb[0].mxu0
    %2653 = vmatprep.mubr.f32.mxu0 0.0
    %v2654 = vand.u32 %v1737, 4294901760
    %2655 = vmatmul.mubr.f32.gmra.mrb[0].mxu0 %v2654
    %v2656 = vpop.f32.mrb[0].mxu0
    %v2657 = vadd.f32 %v2524, %v2656
    %v2658 = vpop.f32.mrb[0].mxu0
    %2659 = vmatprep.mubr.f32.mxu0 0.0
    %v2660 = vand.u32 %v1740, 4294901760
    %2661 = vmatmul.mubr.f32.gmra.mrb[0].mxu0 %v2660
    %v2662 = vpop.f32.mrb[0].mxu0
    %v2663 = vadd.f32 %v2530, %v2662
    %v2664 = vpop.f32.mrb[0].mxu0
    %2665 = vdwg.mxu0
    %2666 = vst [vmem:[#allocation6] sm:$0xff] %v1655
    %2667 = vst [vmem:[#allocation6 + $0x8] sm:$0xff] %v1661
    %2668 = vst [vmem:[#allocation6 + $0x10] sm:$0xff] %v2609
    %2669 = vst [vmem:[#allocation6 + $0x18] sm:$0xff] %v2615
    %2670 = vst [vmem:[#allocation7] sm:$0xff] %v1667
    %2671 = vst [vmem:[#allocation7 + $0x8] sm:$0xff] %v1673
    %2672 = vst [vmem:[#allocation7 + $0x10] sm:$0xff] %v1679
    %2673 = vst [vmem:[#allocation7 + $0x18] sm:$0xff] %v1685
    %2674 = vst [vmem:[#allocation7 + $0x20] sm:$0xff] %v1691
    %2675 = vst [vmem:[#allocation7 + $0x28] sm:$0xff] %v1697
    %2676 = vst [vmem:[#allocation7 + $0x30] sm:$0xff] %v1703
    %2677 = vst [vmem:[#allocation7 + $0x38] sm:$0xff] %v1709
    %2678 = vst [vmem:[#allocation7 + $0x40] sm:$0xff] %v2621
    %2679 = vst [vmem:[#allocation7 + $0x48] sm:$0xff] %v2627
    %2680 = vst [vmem:[#allocation7 + $0x50] sm:$0xff] %v2633
    %2681 = vst [vmem:[#allocation7 + $0x58] sm:$0xff] %v2639
    %2682 = vst [vmem:[#allocation7 + $0x60] sm:$0xff] %v2645
    %2683 = vst [vmem:[#allocation7 + $0x68] sm:$0xff] %v2651
    %2684 = vst [vmem:[#allocation7 + $0x70] sm:$0xff] %v2657
    %2685 = vst [vmem:[#allocation7 + $0x78] sm:$0xff] %v2663
    // Predicated region
    $region21: #{tpu_custom_call.1} parent=1 // pred_check
      _
    $region22: #{tpu_custom_call.1} parent=1 // pred_check_branch
      %2687 = sbr.rel (0) target = $region24
    $region23: #{tpu_custom_call.1} parent=1 // pred_region
      %s2689 = ssub.s32 512, 512
      %2690 = vsyncadd [#allocation5], %s2689
      %s2691 = sshll.u32 [#allocation6], 4
      %s2692 = int_to_ptr.vmem [resolvable:$true] %s2691
      %2697 = dma.vmem_to_hbm [thread:$0]  %s2692, 512, %s2, [#allocation5], 128, 128, 8
    $region24: #{tpu_custom_call.1} parent=1 // pred_fallthru
      _
    // Predicated region
    $region25: #{tpu_custom_call.1} parent=1 // pred_check
      _
    $region26: #{tpu_custom_call.1} parent=1 // pred_check_branch
      %2699 = sbr.rel (0) target = $region28
    $region27: #{tpu_custom_call.1} parent=1 // pred_region
      %s2701 = ssub.s32 2048, 2048
      %2702 = vsyncadd [#allocation8], %s2701
      %s2703 = sshll.u32 [#allocation7], 4
      %s2704 = int_to_ptr.vmem [resolvable:$true] %s2703
      %2709 = dma.vmem_to_hbm [thread:$0]  %s2704, 2048, %s3, [#allocation8], 128, 128, 8
    $region28: #{tpu_custom_call.1} parent=1 // pred_fallthru
      _
    // Predicated region
    $region29: #{tpu_custom_call.1} parent=1 // pred_check
      _
    $region30: #{tpu_custom_call.1} parent=1 // pred_check_branch
      %2711 = sbr.rel (0) target = $region32
    $region31: #{tpu_custom_call.1} parent=1 // pred_region
      %2712 = dma.done [#allocation5], 512
    $region32: #{tpu_custom_call.1} parent=1 // pred_fallthru
      _
    // Predicated region
    $region33: #{tpu_custom_call.1} parent=1 // pred_check
      _
    $region34: #{tpu_custom_call.1} parent=1 // pred_check_branch
      %2714 = sbr.rel (0) target = $region36
    $region35: #{tpu_custom_call.1} parent=1 // pred_region
      %2715 = dma.done [#allocation8], 2048
    $region36: #{tpu_custom_call.1} parent=1 // pred_fallthru
      _
    %2716 = vsyncpa [#allocation4], 1
    %2717 = vsyncpa [#allocation5], 1
    %2718 = vsyncpa [#allocation8], 1

</llo_original>
